<compile_context>
chip_gen: v7x
topology: tpu7x:2x2x1
jax: 0.10.0
libtpu: 0.0.40
codegen_flags: <defaults>
</compile_context>

<pallas_src>
import math

import numpy as np
import jax
import jax.numpy as jnp
from jax.experimental import pallas as pl
from jax.experimental.pallas import tpu as pltpu


def _round_up(n, m):
    return ((n + m - 1) // m) * m


def _vmem_capacity_bytes():
    try:
        info = pltpu.get_tpu_info()
        cap = getattr(info, "vmem_capacity_bytes", None)
        if cap:
            return int(cap)
    except Exception:
        pass
    return 64 << 20  # conservative default: v7x per-TensorCore VMEM


# --------------------------------- kernels ----------------------------------
def _mlp3(x_ref, w1, b1, w2, b2, w3, b3):
    """Three Linear+ReLU layers. MXU dots accumulate in f32; bias/relu in f32."""
    h = jnp.dot(x_ref[...], w1[...], preferred_element_type=jnp.float32)
    h = jnp.maximum(h + b1[...], 0.0).astype(w2.dtype)
    h = jnp.dot(h, w2[...], preferred_element_type=jnp.float32)
    h = jnp.maximum(h + b2[...], 0.0).astype(w3.dtype)
    h = jnp.dot(h, w3[...], preferred_element_type=jnp.float32)
    return jnp.maximum(h + b3[...], 0.0)


def popdx_kernel_folded(x_ref, w1_ref, b1_ref, w2_ref, b2_ref, w3_ref, b3_ref,
                        w4_ref, b4_ref, out_ref, h_scr):
    """Grid = (batch_tile i, label_tile j).  w4_ref = w4 @ y_emb^T tile."""
    # The 3-layer MLP only depends on the batch tile: compute it once per i
    # (at j == 0) and cache it in VMEM scratch for the remaining label tiles.
    @pl.when(pl.program_id(1) == 0)
    def _():
        h_scr[...] = _mlp3(x_ref, w1_ref, b1_ref, w2_ref, b2_ref,
                           w3_ref, b3_ref).astype(h_scr.dtype)

    # Folded tail: h @ (w4 @ y_emb^T) + (b4 @ y_emb^T), lane-dense over labels.
    out = jnp.dot(h_scr[...], w4_ref[...],
                  preferred_element_type=jnp.float32) + b4_ref[...]
    out_ref[...] = out.astype(out_ref.dtype)


def popdx_kernel_proj(x_ref, w1_ref, b1_ref, w2_ref, b2_ref, w3_ref, b3_ref,
                      w4_ref, b4_ref, yT_ref, out_ref, e_scr):
    """Un-folded variant (label_num >> emb_dim): e = h@w4 + b4 cached per batch
    tile; y_emb^T streamed in (E_pad, TL) tiles over the label grid axis."""
    @pl.when(pl.program_id(1) == 0)
    def _():
        h = _mlp3(x_ref, w1_ref, b1_ref, w2_ref, b2_ref,
                  w3_ref, b3_ref).astype(w4_ref.dtype)
        e = jnp.dot(h, w4_ref[...],
                    preferred_element_type=jnp.float32) + b4_ref[...]
        e_scr[...] = e.astype(e_scr.dtype)

    out = jnp.dot(e_scr[...], yT_ref[...], preferred_element_type=jnp.float32)
    out_ref[...] = out.astype(out_ref.dtype)


# ----------------------------- weight preparation ---------------------------
def prepare_popdx_params(params, y_emb, *, compute_dtype=jnp.bfloat16,
                         label_block=1024, fold=None):
    """One-time weight prep (pad / cast / conditional y_emb fold).

    Hoisted out of the per-call path so repeated forward calls reuse the padded
    device arrays.  Returns a dict consumed by popdx_apply().
    """
    F, H = params["w1"].shape
    E = params["w4"].shape[1]
    L = y_emb.shape[0]

    F_pad = _round_up(F, 128)
    H_pad = _round_up(H, 128)
    E_pad = _round_up(E, 128)

    # Balanced label tiling: TL is a multiple of 128 and L_pad = n_label * TL.
    L128 = _round_up(L, 128)
    TL_target = max(128, _round_up(min(label_block, L128), 128))
    n_label = max(1, math.ceil(L128 / TL_target))
    TL = _round_up(math.ceil(L128 / n_label), 128)
    L_pad = n_label * TL

    # Fold last Linear with y_emb^T only when it does not increase MXU work /
    # weight bytes (for realistic POPDx shapes with L >> E we do NOT fold).
    if fold is None:
        fold = H_pad * L_pad <= H_pad * E_pad + E_pad * L_pad

    def pad2(a, rows, cols):
        a = jnp.asarray(a, jnp.float32)
        return jnp.pad(a, ((0, rows - a.shape[0]), (0, cols - a.shape[1])))

    cdt = jnp.dtype(compute_dtype)
    prep = dict(
        folded=bool(fold), compute_dtype=cdt,
        F=F, H=H, E=E, L=L,
        F_pad=F_pad, H_pad=H_pad, E_pad=E_pad, L_pad=L_pad,
        TL=TL, n_label=n_label,
        w1=pad2(params["w1"], F_pad, H_pad).astype(cdt),
        w2=pad2(params["w2"], H_pad, H_pad).astype(cdt),
        w3=pad2(params["w3"], H_pad, H_pad).astype(cdt),
        b1=pad2(params["b1"], 1, H_pad),
        b2=pad2(params["b2"], 1, H_pad),
        b3=pad2(params["b3"], 1, H_pad),
    )
    yT = jnp.asarray(y_emb, jnp.float32).T                      # (E, L)
    if fold:
        w4p = jnp.asarray(params["w4"], jnp.float32) @ yT       # (H, L)
        b4p = jnp.asarray(params["b4"], jnp.float32) @ yT       # (1, L)
        prep["w4"] = pad2(w4p, H_pad, L_pad).astype(cdt)
        prep["b4"] = pad2(b4p, 1, L_pad)
        prep["yT"] = None
    else:
        prep["w4"] = pad2(params["w4"], H_pad, E_pad).astype(cdt)
        prep["b4"] = pad2(params["b4"], 1, E_pad)
        prep["yT"] = pad2(yT, E_pad, L_pad).astype(cdt)
    return prep


# --------------------------------- forward ----------------------------------
def popdx_apply(x, prep, *, block_batch=512, out_dtype=jnp.float32,
                weight_buffers=1):
    """Forward pass with prepared weights.  Returns (B, label_num) out_dtype."""
    B, F = x.shape
    assert F == prep["F"], (F, prep["F"])
    cdt = prep["compute_dtype"]
    it = cdt.itemsize
    out_it = jnp.dtype(out_dtype).itemsize
    F_pad, H_pad, E_pad = prep["F_pad"], prep["H_pad"], prep["E_pad"]
    L, L_pad, TL, n_label = prep["L"], prep["L_pad"], prep["TL"], prep["n_label"]
    folded = prep["folded"]

    # Balanced batch tiling, rounded to 16 rows (bf16 sublane packing).
    n_bt = max(1, math.ceil(B / block_batch))
    TB = _round_up(math.ceil(B / n_bt), 16)
    n_bt = math.ceil(B / TB)
    B_pad = n_bt * TB

    xp = jnp.pad(jnp.asarray(x, jnp.float32),
                 ((0, B_pad - B), (0, F_pad - F))).astype(cdt)

    # ---- BlockSpecs ---------------------------------------------------------
    # Constant-index-map operands are fetched once -> single buffer (Buffered(1)).
    resident_mode = pl.Buffered(1) if weight_buffers == 1 else None
    # Label-streamed operands: single-buffer only if there is a single tile.
    stream_mode = resident_mode if n_label == 1 else None

    def resident(shape):
        return pl.BlockSpec(shape, lambda i, j: (0, 0),
                            pipeline_mode=resident_mode)

    def label_tiled(shape):
        return pl.BlockSpec(shape, lambda i, j: (0, j),
                            pipeline_mode=stream_mode)

    x_spec = pl.BlockSpec((TB, F_pad), lambda i, j: (i, 0))
    out_spec = pl.BlockSpec((TB, TL), lambda i, j: (i, j))

    in_specs = [x_spec,
                resident((F_pad, H_pad)), resident((1, H_pad)),
                resident((H_pad, H_pad)), resident((1, H_pad)),
                resident((H_pad, H_pad)), resident((1, H_pad))]
    if folded:
        in_specs += [label_tiled((H_pad, TL)), label_tiled((1, TL))]
        operands = (xp, prep["w1"], prep["b1"], prep["w2"], prep["b2"],
                    prep["w3"], prep["b3"], prep["w4"], prep["b4"])
        kernel = popdx_kernel_folded
        scratch_bytes = TB * H_pad * it
        scratch = [pltpu.VMEM((TB, H_pad), cdt)]
        tail_flops = H_pad * L_pad
        streamed_tile_bytes = H_pad * TL * it + TL * 4
        streamed_total_bytes = H_pad * L_pad * it + L_pad * 4
    else:
        in_specs += [resident((H_pad, E_pad)), resident((1, E_pad)),
                     label_tiled((E_pad, TL))]
        operands = (xp, prep["w1"], prep["b1"], prep["w2"], prep["b2"],
                    prep["w3"], prep["b3"], prep["w4"], prep["b4"], prep["yT"])
        kernel = popdx_kernel_proj
        scratch_bytes = TB * E_pad * it
        scratch = [pltpu.VMEM((TB, E_pad), cdt)]
        tail_flops = H_pad * E_pad + E_pad * L_pad
        streamed_tile_bytes = E_pad * TL * it
        streamed_total_bytes = E_pad * L_pad * it

    # ---- VMEM budget / cost estimate ---------------------------------------
    wb = 1 if weight_buffers == 1 else 2
    resident_bytes = (F_pad * H_pad + 2 * H_pad * H_pad) * it + 3 * H_pad * 4
    if not folded:
        resident_bytes += H_pad * E_pad * it + E_pad * 4
    stream_bufs = wb if n_label == 1 else 2
    vmem_bytes = (wb * resident_bytes
                  + stream_bufs * streamed_tile_bytes
                  + 2 * TB * F_pad * it            # x tile, double-buffered
                  + 2 * TB * TL * out_it           # out tile, double-buffered
                  + scratch_bytes                  # persistent h / e scratch
                  + 2 * TB * H_pad * 4             # live f32 intermediates
                  + (2 << 20))                     # misc headroom
    vmem_cap = _vmem_capacity_bytes()
    vmem_limit = int(min(max(vmem_bytes, 8 << 20),
                         max(vmem_cap - (12 << 20), 16 << 20)))

    flops = 2 * B_pad * (F_pad * H_pad + 2 * H_pad * H_pad + tail_flops)
    bytes_accessed = (B_pad * F_pad * it + resident_bytes
                      + streamed_total_bytes + B_pad * L_pad * out_it)

    out_padded = pl.pallas_call(
        kernel,
        out_shape=jax.ShapeDtypeStruct((B_pad, L_pad), out_dtype),
        grid=(n_bt, n_label),
        in_specs=in_specs,
        out_specs=out_spec,
        scratch_shapes=scratch,
        compiler_params=pltpu.CompilerParams(
            dimension_semantics=("parallel", "arbitrary"),
            vmem_limit_bytes=vmem_limit,
        ),
        cost_estimate=pl.CostEstimate(
            flops=int(flops), transcendentals=0,
            bytes_accessed=int(bytes_accessed),
        ),
    )(*operands)

    return out_padded[:B, :L]


def popdx_forward(x, params, y_emb, *, compute_dtype=jnp.bfloat16,
                  block_batch=512, label_block=1024, out_dtype=jnp.float32,
                  weight_buffers=1, fold=None):
    """Convenience wrapper: prepare + apply (prefer caching prepare_popdx_params)."""
    prep = prepare_popdx_params(params, y_emb, compute_dtype=compute_dtype,
                                label_block=label_block, fold=fold)
    return popdx_apply(x, prep, block_batch=block_batch, out_dtype=out_dtype,
                       weight_buffers=weight_buffers)


# ------------------------------ init / reference ----------------------------
def init_params(key, feature_num, hidden_size, emb_dim):
    """Kaiming-normal-ish init; shapes are the transpose of nn.Linear's."""
    ks = jax.random.split(key, 8)

    def kaiming(k, fan_in, shape):
        return jax.random.normal(k, shape, jnp.float32) * jnp.sqrt(2.0 / fan_in)

    return {
        "w1": kaiming(ks[0], feature_num, (feature_num, hidden_size)),
        "b1": 0.1 * jax.random.normal(ks[4], (1, hidden_size), jnp.float32),
        "w2": kaiming(ks[1], hidden_size, (hidden_size, hidden_size)),
        "b2": 0.1 * jax.random.normal(ks[5], (1, hidden_size), jnp.float32),
        "w3": kaiming(ks[2], hidden_size, (hidden_size, hidden_size)),
        "b3": 0.1 * jax.random.normal(ks[6], (1, hidden_size), jnp.float32),
        "w4": kaiming(ks[3], hidden_size, (hidden_size, emb_dim)),
        "b4": 0.1 * jax.random.normal(ks[7], (1, emb_dim), jnp.float32),
    }


def reference_forward_np(x, params, y_emb):
    """Exact float64 reference of the original module's forward."""
    xf = np.asarray(x, np.float64)

    def lin(h, w, b):
        return h @ np.asarray(w, np.float64) + np.asarray(b, np.float64)

    h = np.maximum(lin(xf, params["w1"], params["b1"]), 0.0)
    h = np.maximum(lin(h, params["w2"], params["b2"]), 0.0)
    h = np.maximum(lin(h, params["w3"], params["b3"]), 0.0)
    e = lin(h, params["w4"], params["b4"])
    return e @ np.asarray(y_emb, np.float64).T


# ----------------------------------- main -----------------------------------
if __name__ == "__main__":
    root = jax.random.PRNGKey(0)

    def run_case(seed_key, batch, feature_num, hidden_size, emb_dim, label_num,
                 *, block_batch, label_block):
        kx, kp, ky = jax.random.split(seed_key, 3)
        x = jax.random.normal(kx, (batch, feature_num), jnp.float32)
        y_emb = jax.random.normal(ky, (label_num, emb_dim), jnp.float32)
        params = init_params(kp, feature_num, hidden_size, emb_dim)
        ref = reference_forward_np(x, params, y_emb)

        folded = None
        for cdt, atol, rtol in ((jnp.float32, 2e-3, 2e-3),
                                (jnp.bfloat16, 2e-1, 5e-2)):
            prep = prepare_popdx_params(params, y_emb, compute_dtype=cdt,
                                        label_block=label_block)
            folded = prep["folded"]
            try:
                out = jax.block_until_ready(
                    popdx_apply(x, prep, block_batch=block_batch))
            except Exception:
                # Fallback for JAX versions where pl.Buffered(1) single
                # buffering of resident weights is not supported.
                out = jax.block_until_ready(
                    popdx_apply(x, prep, block_batch=block_batch,
                                weight_buffers=2))
            assert out.shape == (batch, label_num)
            assert np.allclose(np.asarray(out, np.float64), ref,
                               atol=atol, rtol=rtol), (str(cdt), folded)
        return folded

    k1, k2 = jax.random.split(root, 2)

    # Case 1: folded tail (label_num comparable to emb_dim after padding),
    # two batch tiles, single label tile.
    folded1 = run_case(k1, batch=24, feature_num=200, hidden_size=96,
                       emb_dim=16, label_num=120,
                       block_batch=16, label_block=1024)

    # Case 2: label_num >> emb_dim -> un-folded path, 3 label tiles (the MLP
    # result is cached in scratch and reused across label tiles).
    folded2 = run_case(k2, batch=8, feature_num=64, hidden_size=200,
                       emb_dim=16, label_num=300,
                       block_batch=512, label_block=128)

    assert folded1 and not folded2  # both kernel variants were exercised
    print("KERNEL_OK")
</pallas_src>

<mosaic_0001>
module attributes {stable_mosaic.version = 11 : i64} {
  func.func @popdx_kernel_folded(%arg0: i32, %arg1: i32, %arg2: memref<16x256xf32, #tpu.memory_space<vmem>>, %arg3: memref<256x128xf32, #tpu.memory_space<vmem>>, %arg4: memref<1x128xf32, #tpu.memory_space<vmem>>, %arg5: memref<128x128xf32, #tpu.memory_space<vmem>>, %arg6: memref<1x128xf32, #tpu.memory_space<vmem>>, %arg7: memref<128x128xf32, #tpu.memory_space<vmem>>, %arg8: memref<1x128xf32, #tpu.memory_space<vmem>>, %arg9: memref<128x128xf32, #tpu.memory_space<vmem>>, %arg10: memref<1x128xf32, #tpu.memory_space<vmem>>, %arg11: memref<16x128xf32, #tpu.memory_space<vmem>>, %arg12: memref<16x128xf32, #tpu.memory_space<vmem>>) attributes {dimension_semantics = [#tpu.dimension_semantics<parallel>, #tpu.dimension_semantics<arbitrary>], iteration_bounds = array<i64: 2, 1>, scalar_prefetch = 0 : i64, scratch_operands = 1 : i64, tpu.core_type = #tpu.core_type<tc>, window_params = [{transform_indices = @transform_0, window_bounds = array<i64: 16, 256>}, {pipeline_mode = #tpu.pipeline_mode<synchronous>, transform_indices = @transform_1, window_bounds = array<i64: 256, 128>}, {pipeline_mode = #tpu.pipeline_mode<synchronous>, transform_indices = @transform_2, window_bounds = array<i64: 1, 128>}, {pipeline_mode = #tpu.pipeline_mode<synchronous>, transform_indices = @transform_3, window_bounds = array<i64: 128, 128>}, {pipeline_mode = #tpu.pipeline_mode<synchronous>, transform_indices = @transform_4, window_bounds = array<i64: 1, 128>}, {pipeline_mode = #tpu.pipeline_mode<synchronous>, transform_indices = @transform_5, window_bounds = array<i64: 128, 128>}, {pipeline_mode = #tpu.pipeline_mode<synchronous>, transform_indices = @transform_6, window_bounds = array<i64: 1, 128>}, {pipeline_mode = #tpu.pipeline_mode<synchronous>, transform_indices = @transform_7, window_bounds = array<i64: 128, 128>}, {pipeline_mode = #tpu.pipeline_mode<synchronous>, transform_indices = @transform_8, window_bounds = array<i64: 1, 128>}, {transform_indices = @transform_9, window_bounds = array<i64: 16, 128>}]} {
    %c0_i32 = arith.constant 0 : i32
    %0 = arith.cmpi eq, %arg1, %c0_i32 : i32
    %1 = arith.extui %0 : i1 to i32
    %c0_i32_0 = arith.constant 0 : i32
    %2 = arith.cmpi ne, %1, %c0_i32_0 : i32
    scf.if %2 {
      %c0_8 = arith.constant 0 : index
      %c0_9 = arith.constant 0 : index
      %10 = vector.load %arg2[%c0_8, %c0_9] : memref<16x256xf32, #tpu.memory_space<vmem>>, vector<16x256xf32>
      %c0_10 = arith.constant 0 : index
      %c0_11 = arith.constant 0 : index
      %11 = vector.load %arg3[%c0_10, %c0_11] : memref<256x128xf32, #tpu.memory_space<vmem>>, vector<256x128xf32>
      %cst_12 = arith.constant dense<0.000000e+00> : vector<16x128xf32>
      %12 = tpu.matmul %10, %11, %cst_12 {dimension_numbers = #tpu.dot_dimension_numbers<[1], [0], [0], [1], [0, 0, 1, 1], [], []>} : vector<16x256xf32>, vector<256x128xf32>, vector<16x128xf32> -> vector<16x128xf32>
      %c0_13 = arith.constant 0 : index
      %c0_14 = arith.constant 0 : index
      %13 = vector.load %arg4[%c0_13, %c0_14] : memref<1x128xf32, #tpu.memory_space<vmem>>, vector<1x128xf32>
      %14 = vector.broadcast %13 : vector<1x128xf32> to vector<16x128xf32>
      %15 = arith.addf %12, %14 : vector<16x128xf32>
      %cst_15 = arith.constant 0.000000e+00 : f32
      %16 = vector.broadcast %cst_15 : f32 to vector<16x128xf32>
      %17 = arith.maximumf %15, %16 : vector<16x128xf32>
      %c0_16 = arith.constant 0 : index
      %c0_17 = arith.constant 0 : index
      %18 = vector.load %arg5[%c0_16, %c0_17] : memref<128x128xf32, #tpu.memory_space<vmem>>, vector<128x128xf32>
      %cst_18 = arith.constant dense<0.000000e+00> : vector<16x128xf32>
      %19 = tpu.matmul %17, %18, %cst_18 {dimension_numbers = #tpu.dot_dimension_numbers<[1], [0], [0], [1], [0, 0, 1, 1], [], []>} : vector<16x128xf32>, vector<128x128xf32>, vector<16x128xf32> -> vector<16x128xf32>
      %c0_19 = arith.constant 0 : index
      %c0_20 = arith.constant 0 : index
      %20 = vector.load %arg6[%c0_19, %c0_20] : memref<1x128xf32, #tpu.memory_space<vmem>>, vector<1x128xf32>
      %21 = vector.broadcast %20 : vector<1x128xf32> to vector<16x128xf32>
      %22 = arith.addf %19, %21 : vector<16x128xf32>
      %cst_21 = arith.constant 0.000000e+00 : f32
      %23 = vector.broadcast %cst_21 : f32 to vector<16x128xf32>
      %24 = arith.maximumf %22, %23 : vector<16x128xf32>
      %c0_22 = arith.constant 0 : index
      %c0_23 = arith.constant 0 : index
      %25 = vector.load %arg7[%c0_22, %c0_23] : memref<128x128xf32, #tpu.memory_space<vmem>>, vector<128x128xf32>
      %cst_24 = arith.constant dense<0.000000e+00> : vector<16x128xf32>
      %26 = tpu.matmul %24, %25, %cst_24 {dimension_numbers = #tpu.dot_dimension_numbers<[1], [0], [0], [1], [0, 0, 1, 1], [], []>} : vector<16x128xf32>, vector<128x128xf32>, vector<16x128xf32> -> vector<16x128xf32>
      %c0_25 = arith.constant 0 : index
      %c0_26 = arith.constant 0 : index
      %27 = vector.load %arg8[%c0_25, %c0_26] : memref<1x128xf32, #tpu.memory_space<vmem>>, vector<1x128xf32>
      %28 = vector.broadcast %27 : vector<1x128xf32> to vector<16x128xf32>
      %29 = arith.addf %26, %28 : vector<16x128xf32>
      %cst_27 = arith.constant 0.000000e+00 : f32
      %30 = vector.broadcast %cst_27 : f32 to vector<16x128xf32>
      %31 = arith.maximumf %29, %30 : vector<16x128xf32>
      %c0_28 = arith.constant 0 : index
      %c0_29 = arith.constant 0 : index
      %32 = vector.load %arg12[%c0_28, %c0_29] : memref<16x128xf32, #tpu.memory_space<vmem>>, vector<16x128xf32>
      tpu.vector_store %arg12[%c0_28, %c0_29], %31 {strides = array<i32>} : memref<16x128xf32, #tpu.memory_space<vmem>>, vector<16x128xf32>,
    } else {
    }
    %c0 = arith.constant 0 : index
    %c0_1 = arith.constant 0 : index
    %3 = vector.load %arg12[%c0, %c0_1] : memref<16x128xf32, #tpu.memory_space<vmem>>, vector<16x128xf32>
    %c0_2 = arith.constant 0 : index
    %c0_3 = arith.constant 0 : index
    %4 = vector.load %arg9[%c0_2, %c0_3] : memref<128x128xf32, #tpu.memory_space<vmem>>, vector<128x128xf32>
    %cst = arith.constant dense<0.000000e+00> : vector<16x128xf32>
    %5 = tpu.matmul %3, %4, %cst {dimension_numbers = #tpu.dot_dimension_numbers<[1], [0], [0], [1], [0, 0, 1, 1], [], []>} : vector<16x128xf32>, vector<128x128xf32>, vector<16x128xf32> -> vector<16x128xf32>
    %c0_4 = arith.constant 0 : index
    %c0_5 = arith.constant 0 : index
    %6 = vector.load %arg10[%c0_4, %c0_5] : memref<1x128xf32, #tpu.memory_space<vmem>>, vector<1x128xf32>
    %7 = vector.broadcast %6 : vector<1x128xf32> to vector<16x128xf32>
    %8 = arith.addf %5, %7 : vector<16x128xf32>
    %c0_6 = arith.constant 0 : index
    %c0_7 = arith.constant 0 : index
    %9 = vector.load %arg11[%c0_6, %c0_7] : memref<16x128xf32, #tpu.memory_space<vmem>>, vector<16x128xf32>
    tpu.vector_store %arg11[%c0_6, %c0_7], %8 {strides = array<i32>} : memref<16x128xf32, #tpu.memory_space<vmem>>, vector<16x128xf32>,
    return
  }
  func.func @transform_0(%arg0: i32, %arg1: i32) -> (i32, i32) {
    %c0_i32 = arith.constant 0 : i32
    %c0_i32_0 = arith.constant 0 : i32
    return %arg0, %c0_i32 : i32, i32
  }
  func.func @transform_1(%arg0: i32, %arg1: i32) -> (i32, i32) {
    %c0_i32 = arith.constant 0 : i32
    %c0_i32_0 = arith.constant 0 : i32
    %c0_i32_1 = arith.constant 0 : i32
    return %c0_i32, %c0_i32_0 : i32, i32
  }
  func.func @transform_2(%arg0: i32, %arg1: i32) -> (i32, i32) {
    %c0_i32 = arith.constant 0 : i32
    %c0_i32_0 = arith.constant 0 : i32
    %c0_i32_1 = arith.constant 0 : i32
    return %c0_i32, %c0_i32_0 : i32, i32
  }
  func.func @transform_3(%arg0: i32, %arg1: i32) -> (i32, i32) {
    %c0_i32 = arith.constant 0 : i32
    %c0_i32_0 = arith.constant 0 : i32
    %c0_i32_1 = arith.constant 0 : i32
    return %c0_i32, %c0_i32_0 : i32, i32
  }
  func.func @transform_4(%arg0: i32, %arg1: i32) -> (i32, i32) {
    %c0_i32 = arith.constant 0 : i32
    %c0_i32_0 = arith.constant 0 : i32
    %c0_i32_1 = arith.constant 0 : i32
    return %c0_i32, %c0_i32_0 : i32, i32
  }
  func.func @transform_5(%arg0: i32, %arg1: i32) -> (i32, i32) {
    %c0_i32 = arith.constant 0 : i32
    %c0_i32_0 = arith.constant 0 : i32
    %c0_i32_1 = arith.constant 0 : i32
    return %c0_i32, %c0_i32_0 : i32, i32
  }
  func.func @transform_6(%arg0: i32, %arg1: i32) -> (i32, i32) {
    %c0_i32 = arith.constant 0 : i32
    %c0_i32_0 = arith.constant 0 : i32
    %c0_i32_1 = arith.constant 0 : i32
    return %c0_i32, %c0_i32_0 : i32, i32
  }
  func.func @transform_7(%arg0: i32, %arg1: i32) -> (i32, i32) {
    %c0_i32 = arith.constant 0 : i32
    %c0_i32_0 = arith.constant 0 : i32
    return %c0_i32, %arg1 : i32, i32
  }
  func.func @transform_8(%arg0: i32, %arg1: i32) -> (i32, i32) {
    %c0_i32 = arith.constant 0 : i32
    %c0_i32_0 = arith.constant 0 : i32
    return %c0_i32, %arg1 : i32, i32
  }
  func.func @transform_9(%arg0: i32, %arg1: i32) -> (i32, i32) {
    %c0_i32 = arith.constant 0 : i32
    return %arg0, %arg1 : i32, i32
  }
}

module attributes {stable_mosaic.version = 11 : i64} {
  func.func @popdx_kernel_folded(%arg0: i32, %arg1: i32, %arg2: memref<16x256xf32, #tpu.memory_space<vmem>>, %arg3: memref<256x128xf32, #tpu.memory_space<vmem>>, %arg4: memref<1x128xf32, #tpu.memory_space<vmem>>, %arg5: memref<128x128xf32, #tpu.memory_space<vmem>>, %arg6: memref<1x128xf32, #tpu.memory_space<vmem>>, %arg7: memref<128x128xf32, #tpu.memory_space<vmem>>, %arg8: memref<1x128xf32, #tpu.memory_space<vmem>>, %arg9: memref<128x128xf32, #tpu.memory_space<vmem>>, %arg10: memref<1x128xf32, #tpu.memory_space<vmem>>, %arg11: memref<16x128xf32, #tpu.memory_space<vmem>>, %arg12: memref<16x128xf32, #tpu.memory_space<vmem>>) attributes {dimension_semantics = [#tpu.dimension_semantics<parallel>, #tpu.dimension_semantics<arbitrary>], iteration_bounds = array<i64: 2, 1>, scalar_prefetch = 0 : i64, scratch_operands = 1 : i64, tpu.core_type = #tpu.core_type<tc>, window_params = [{transform_indices = @transform_0, window_bounds = array<i64: 16, 256>}, {pipeline_mode = #tpu.pipeline_mode<synchronous>, transform_indices = @transform_1, window_bounds = array<i64: 256, 128>}, {pipeline_mode = #tpu.pipeline_mode<synchronous>, transform_indices = @transform_2, window_bounds = array<i64: 1, 128>}, {pipeline_mode = #tpu.pipeline_mode<synchronous>, transform_indices = @transform_3, window_bounds = array<i64: 128, 128>}, {pipeline_mode = #tpu.pipeline_mode<synchronous>, transform_indices = @transform_4, window_bounds = array<i64: 1, 128>}, {pipeline_mode = #tpu.pipeline_mode<synchronous>, transform_indices = @transform_5, window_bounds = array<i64: 128, 128>}, {pipeline_mode = #tpu.pipeline_mode<synchronous>, transform_indices = @transform_6, window_bounds = array<i64: 1, 128>}, {transform_indices = @transform_7, window_bounds = array<i64: 128, 128>}, {transform_indices = @transform_8, window_bounds = array<i64: 1, 128>}, {transform_indices = @transform_9, window_bounds = array<i64: 16, 128>}]} {
    %c0_i32 = arith.constant 0 : i32
    %0 = arith.cmpi eq, %arg1, %c0_i32 : i32
    %1 = arith.extui %0 : i1 to i32
    %c0_i32_0 = arith.constant 0 : i32
    %2 = arith.cmpi ne, %1, %c0_i32_0 : i32
    scf.if %2 {
      %c0_8 = arith.constant 0 : index
      %c0_9 = arith.constant 0 : index
      %10 = vector.load %arg2[%c0_8, %c0_9] : memref<16x256xf32, #tpu.memory_space<vmem>>, vector<16x256xf32>
      %c0_10 = arith.constant 0 : index
      %c0_11 = arith.constant 0 : index
      %11 = vector.load %arg3[%c0_10, %c0_11] : memref<256x128xf32, #tpu.memory_space<vmem>>, vector<256x128xf32>
      %cst_12 = arith.constant dense<0.000000e+00> : vector<16x128xf32>
      %12 = tpu.matmul %10, %11, %cst_12 {dimension_numbers = #tpu.dot_dimension_numbers<[1], [0], [0], [1], [0, 0, 1, 1], [], []>} : vector<16x256xf32>, vector<256x128xf32>, vector<16x128xf32> -> vector<16x128xf32>
      %c0_13 = arith.constant 0 : index
      %c0_14 = arith.constant 0 : index
      %13 = vector.load %arg4[%c0_13, %c0_14] : memref<1x128xf32, #tpu.memory_space<vmem>>, vector<1x128xf32>
      %14 = vector.broadcast %13 : vector<1x128xf32> to vector<16x128xf32>
      %15 = arith.addf %12, %14 : vector<16x128xf32>
      %cst_15 = arith.constant 0.000000e+00 : f32
      %16 = vector.broadcast %cst_15 : f32 to vector<16x128xf32>
      %17 = arith.maximumf %15, %16 : vector<16x128xf32>
      %c0_16 = arith.constant 0 : index
      %c0_17 = arith.constant 0 : index
      %18 = vector.load %arg5[%c0_16, %c0_17] : memref<128x128xf32, #tpu.memory_space<vmem>>, vector<128x128xf32>
      %cst_18 = arith.constant dense<0.000000e+00> : vector<16x128xf32>
      %19 = tpu.matmul %17, %18, %cst_18 {dimension_numbers = #tpu.dot_dimension_numbers<[1], [0], [0], [1], [0, 0, 1, 1], [], []>} : vector<16x128xf32>, vector<128x128xf32>, vector<16x128xf32> -> vector<16x128xf32>
      %c0_19 = arith.constant 0 : index
      %c0_20 = arith.constant 0 : index
      %20 = vector.load %arg6[%c0_19, %c0_20] : memref<1x128xf32, #tpu.memory_space<vmem>>, vector<1x128xf32>
      %21 = vector.broadcast %20 : vector<1x128xf32> to vector<16x128xf32>
      %22 = arith.addf %19, %21 : vector<16x128xf32>
      %cst_21 = arith.constant 0.000000e+00 : f32
      %23 = vector.broadcast %cst_21 : f32 to vector<16x128xf32>
      %24 = arith.maximumf %22, %23 : vector<16x128xf32>
      %c0_22 = arith.constant 0 : index
      %c0_23 = arith.constant 0 : index
      %25 = vector.load %arg7[%c0_22, %c0_23] : memref<128x128xf32, #tpu.memory_space<vmem>>, vector<128x128xf32>
      %cst_24 = arith.constant dense<0.000000e+00> : vector<16x128xf32>
      %26 = tpu.matmul %24, %25, %cst_24 {dimension_numbers = #tpu.dot_dimension_numbers<[1], [0], [0], [1], [0, 0, 1, 1], [], []>} : vector<16x128xf32>, vector<128x128xf32>, vector<16x128xf32> -> vector<16x128xf32>
      %c0_25 = arith.constant 0 : index
      %c0_26 = arith.constant 0 : index
      %27 = vector.load %arg8[%c0_25, %c0_26] : memref<1x128xf32, #tpu.memory_space<vmem>>, vector<1x128xf32>
      %28 = vector.broadcast %27 : vector<1x128xf32> to vector<16x128xf32>
      %29 = arith.addf %26, %28 : vector<16x128xf32>
      %cst_27 = arith.constant 0.000000e+00 : f32
      %30 = vector.broadcast %cst_27 : f32 to vector<16x128xf32>
      %31 = arith.maximumf %29, %30 : vector<16x128xf32>
      %c0_28 = arith.constant 0 : index
      %c0_29 = arith.constant 0 : index
      %32 = vector.load %arg12[%c0_28, %c0_29] : memref<16x128xf32, #tpu.memory_space<vmem>>, vector<16x128xf32>
      tpu.vector_store %arg12[%c0_28, %c0_29], %31 {strides = array<i32>} : memref<16x128xf32, #tpu.memory_space<vmem>>, vector<16x128xf32>,
    } else {
    }
    %c0 = arith.constant 0 : index
    %c0_1 = arith.constant 0 : index
    %3 = vector.load %arg12[%c0, %c0_1] : memref<16x128xf32, #tpu.memory_space<vmem>>, vector<16x128xf32>
    %c0_2 = arith.constant 0 : index
    %c0_3 = arith.constant 0 : index
    %4 = vector.load %arg9[%c0_2, %c0_3] : memref<128x128xf32, #tpu.memory_space<vmem>>, vector<128x128xf32>
    %cst = arith.constant dense<0.000000e+00> : vector<16x128xf32>
    %5 = tpu.matmul %3, %4, %cst {dimension_numbers = #tpu.dot_dimension_numbers<[1], [0], [0], [1], [0, 0, 1, 1], [], []>} : vector<16x128xf32>, vector<128x128xf32>, vector<16x128xf32> -> vector<16x128xf32>
    %c0_4 = arith.constant 0 : index
    %c0_5 = arith.constant 0 : index
    %6 = vector.load %arg10[%c0_4, %c0_5] : memref<1x128xf32, #tpu.memory_space<vmem>>, vector<1x128xf32>
    %7 = vector.broadcast %6 : vector<1x128xf32> to vector<16x128xf32>
    %8 = arith.addf %5, %7 : vector<16x128xf32>
    %c0_6 = arith.constant 0 : index
    %c0_7 = arith.constant 0 : index
    %9 = vector.load %arg11[%c0_6, %c0_7] : memref<16x128xf32, #tpu.memory_space<vmem>>, vector<16x128xf32>
    tpu.vector_store %arg11[%c0_6, %c0_7], %8 {strides = array<i32>} : memref<16x128xf32, #tpu.memory_space<vmem>>, vector<16x128xf32>,
    return
  }
  func.func @transform_0(%arg0: i32, %arg1: i32) -> (i32, i32) {
    %c0_i32 = arith.constant 0 : i32
    %c0_i32_0 = arith.constant 0 : i32
    return %arg0, %c0_i32 : i32, i32
  }
  func.func @transform_1(%arg0: i32, %arg1: i32) -> (i32, i32) {
    %c0_i32 = arith.constant 0 : i32
    %c0_i32_0 = arith.constant 0 : i32
    %c0_i32_1 = arith.constant 0 : i32
    return %c0_i32, %c0_i32_0 : i32, i32
  }
  func.func @transform_2(%arg0: i32, %arg1: i32) -> (i32, i32) {
    %c0_i32 = arith.constant 0 : i32
    %c0_i32_0 = arith.constant 0 : i32
    %c0_i32_1 = arith.constant 0 : i32
    return %c0_i32, %c0_i32_0 : i32, i32
  }
  func.func @transform_3(%arg0: i32, %arg1: i32) -> (i32, i32) {
    %c0_i32 = arith.constant 0 : i32
    %c0_i32_0 = arith.constant 0 : i32
    %c0_i32_1 = arith.constant 0 : i32
    return %c0_i32, %c0_i32_0 : i32, i32
  }
  func.func @transform_4(%arg0: i32, %arg1: i32) -> (i32, i32) {
    %c0_i32 = arith.constant 0 : i32
    %c0_i32_0 = arith.constant 0 : i32
    %c0_i32_1 = arith.constant 0 : i32
    return %c0_i32, %c0_i32_0 : i32, i32
  }
  func.func @transform_5(%arg0: i32, %arg1: i32) -> (i32, i32) {
    %c0_i32 = arith.constant 0 : i32
    %c0_i32_0 = arith.constant 0 : i32
    %c0_i32_1 = arith.constant 0 : i32
    return %c0_i32, %c0_i32_0 : i32, i32
  }
  func.func @transform_6(%arg0: i32, %arg1: i32) -> (i32, i32) {
    %c0_i32 = arith.constant 0 : i32
    %c0_i32_0 = arith.constant 0 : i32
    %c0_i32_1 = arith.constant 0 : i32
    return %c0_i32, %c0_i32_0 : i32, i32
  }
  func.func @transform_7(%arg0: i32, %arg1: i32) -> (i32, i32) {
    %c0_i32 = arith.constant 0 : i32
    %c0_i32_0 = arith.constant 0 : i32
    return %c0_i32, %arg1 : i32, i32
  }
  func.func @transform_8(%arg0: i32, %arg1: i32) -> (i32, i32) {
    %c0_i32 = arith.constant 0 : i32
    %c0_i32_0 = arith.constant 0 : i32
    return %c0_i32, %arg1 : i32, i32
  }
  func.func @transform_9(%arg0: i32, %arg1: i32) -> (i32, i32) {
    %c0_i32 = arith.constant 0 : i32
    return %arg0, %arg1 : i32, i32
  }
}

</mosaic_0001>

<llo_original>
// kernel: tpu_custom_call.1
$region0: #{tpu_custom_call.1}
  #allocation0 [shape = 'u32[]', space=smem, size = 0x4, offset = 0x4, fixed_abs, tag = 'smem constant byte address 0x4 - core index']
  #allocation1 [shape = 'u32[144,128]{1,0:T(1,128)}', space=vmem, size = 0x12000, scoped, tag = 'internal scratch']
  #allocation2 [shape = 'f32[16,128]{1,0:T(8,128)}', space=vmem, size = 0x2000, scoped, tag = 'scratch operand']
  %s0 = inlined_call_operand.hbm [shape: f32[32,256], index: 0, kind: input, shape index: {}]
  %s1 = inlined_call_operand.hbm [shape: f32[256,128], index: 1, kind: input, shape index: {}]
  %s2 = inlined_call_operand.vmem [shape: f32[1,128], index: 2, kind: input, shape index: {}]
  %s3 = inlined_call_operand.hbm [shape: f32[128,128], index: 3, kind: input, shape index: {}]
  %s4 = inlined_call_operand.vmem [shape: f32[1,128], index: 4, kind: input, shape index: {}]
  %s5 = inlined_call_operand.hbm [shape: f32[128,128], index: 5, kind: input, shape index: {}]
  %s6 = inlined_call_operand.vmem [shape: f32[1,128], index: 6, kind: input, shape index: {}]
  %s7 = inlined_call_operand.hbm [shape: f32[128,128], index: 7, kind: input, shape index: {}]
  %s8 = inlined_call_operand.vmem [shape: f32[1,128], index: 8, kind: input, shape index: {}]
  %s9 = inlined_call_operand.hbm [shape: f32[32,128], index: 9, kind: output, shape index: {}]
  %s10 = sld [smem:[#allocation0]]
  $region93: #{tpu_custom_call.1} parent=0
    _
  %s12 = ssub.s32 1, %s10
  %s13 = scalar_select 0, %s12, %s10
  $region1: #{tpu_custom_call.1} parent=0
    #allocation3 [shape = 'u8[32768]{0}', space=vmem, size = 0x8000, scoped, tag = 'input window, operand 0']
    #allocation4 [shape = 's32[2]{0}', space=sflag, size = 0x8, scoped, tag = 'scoped memory for tpu_custom_call.1']
    #allocation5 [shape = 's32[2]{0}', space=sflag, size = 0x8, scoped, tag = 'scoped memory for tpu_custom_call.1']
    #allocation6 [shape = 'u8[131072]{0}', space=vmem, size = 0x20000, scoped, tag = 'input window, operand 1, single buffered']
    #allocation7 [shape = 's32[1]{0}', space=sflag, size = 0x4, scoped, tag = 'scoped memory for tpu_custom_call.1']
    #allocation8 [shape = 'u8[65536]{0}', space=vmem, size = 0x10000, scoped, tag = 'input window, operand 3, single buffered']
    #allocation9 [shape = 'u8[65536]{0}', space=vmem, size = 0x10000, scoped, tag = 'input window, operand 5, single buffered']
    #allocation10 [shape = 's32[1]{0}', space=sflag, size = 0x4, scoped, tag = 'scoped memory for tpu_custom_call.1']
    #allocation11 [shape = 'u8[65536]{0}', space=vmem, size = 0x10000, scoped, tag = 'input window, operand 7, single buffered']
    #allocation12 [shape = 'u8[16384]{0}', space=vmem, size = 0x4000, scoped, tag = 'output window, operand 0']
    %14 = vsyncpa [#allocation4], 0
    %s15 = scalar_lea.sflag [#allocation4], 1
    %16 = vsyncpa %s15, 0
    %17 = vsyncpa [#allocation7], 0
    %18 = vsyncpa [#allocation10], 0
    %19 = vsyncpa [#allocation5], 0
    %s20 = scalar_lea.sflag [#allocation5], 1
    %21 = vsyncpa %s20, 0
    loop: start=0, step=1, limit=4
    $region2: #{tpu_custom_call.1} parent=1 // loop_pre_header
      _
    $region3: #{tpu_custom_call.1} parent=1 // loop_header
      %s23 = sphi 0, %s27
      %p24 = scmp.ge.s32.totalorder %s23, 4
      %s30 = sphi 0, %s42
      %s31 = sphi 0, %s38
      %s32 = sphi 0, %s30
      %s33 = sphi 0, %s31
      %s34 = sphi 0, %s32
      %s35 = sphi 0, %s33
      %s45 = sphi 0, %s47
      %s48 = sphi 0, %s45
      %s49 = sphi 0, %s48
      %s65 = sphi 0, %s49
      %s69 = sphi 0, %s69
      %s71 = sphi 0, %s69
      %s72 = sphi 0, %s71
      %s86 = sphi 0, %s72
      %s90 = sphi 0, %s90
      %s92 = sphi 0, %s90
      %s93 = sphi 0, %s92
      %s107 = sphi 0, %s93
      %s111 = sphi 0, %s111
      %s113 = sphi 0, %s111
      %s114 = sphi 0, %s113
      %s128 = sphi 0, %s114
      %s132 = sphi 0, %s132
      %s134 = sphi 0, %s132
      %s135 = sphi 0, %s134
      %s149 = sphi 0, %s135
      %s153 = sphi 0, %s153
      %s155 = sphi 0, %s153
      %s156 = sphi 0, %s155
      %s170 = sphi 0, %s156
      %s174 = sphi 0, %s174
      %s176 = sphi 0, %s174
      %s177 = sphi 0, %s176
      %s191 = sphi 0, %s177
      %s197 = sphi 0, %s199
      %s200 = sphi 0, %s197
      %s201 = sphi 0, %s200
      %s217 = sphi 0, %s201
      %s223 = sphi 0, %s225
      %s226 = sphi 0, %s223
      %s227 = sphi 0, %s226
      %s243 = sphi 0, %s227
      %s251 = sphi 0, %s253
      %s254 = sphi 0, %s251
      %s255 = sphi 0, %s254
      %s271 = sphi 0, %s255
    $region4: #{tpu_custom_call.1} parent=1 // loop_header_branch
      %26 = sbr.rel (%p24) target = $region8
    $region5: #{tpu_custom_call.1} parent=1 // loop_body
      %s28 = ssub.s32 %s23, 1
      %s29 = ssub.s32 %s23, 2
      %s36 = sadd.s32 1, %s31
      %p37 = scmp.ge.s32.totalorder %s36, 1
      %s38 = scalar_select %p37, 0, %s36
      %s39 = sadd.s32 1, %s30
      %s40 = scalar_select %p37, %s39, %s30
      %p41 = scmp.ge.s32.totalorder %s40, 2
      %s42 = scalar_select %p41, 0, %s40
      %s43 = ssub.s32 %s30, %s42
      %p44 = scmp.eq.s32.totalorder %s43, 0
      %s46 = sadd.s32 %s45, 1
      %s47 = scalar_select %p44, %s45, %s46
      %p50 = pneg %p44
      %p51 = scmp.eq.s32.totalorder %s23, 1
      %p52 = por %p50, %p51
      %p53 = scmp.ne.s32.totalorder %s45, %s48
      %p54 = scmp.eq.s32.totalorder %s23, 0
      %p55 = por %p53, %p54
      %p56 = scmp.ne.s32.totalorder %s45, %s48
      %p57 = scmp.eq.s32.totalorder %s28, 1
      %p58 = por %p56, %p57
      %p59 = scmp.ne.s32.totalorder %s48, %s49
      %p60 = scmp.eq.s32.totalorder %s28, 0
      %p61 = por %p59, %p60
      %p62 = scmp.ne.s32.totalorder %s48, %s49
      %p63 = scmp.eq.s32.totalorder %s29, 1
      %p64 = por %p62, %p63
      %p66 = scmp.ne.s32.totalorder %s49, %s65
      %p67 = scmp.eq.s32.totalorder %s29, 0
      %p68 = por %p66, %p67
      %s70 = sadd.s32 %s69, 1
      %p73 = scmp.eq.s32.totalorder %s23, 1
      %p74 = scmp.ne.s32.totalorder %s69, %s71
      %p75 = scmp.eq.s32.totalorder %s23, 0
      %p76 = por %p74, %p75
      %p77 = scmp.ne.s32.totalorder %s69, %s71
      %p78 = scmp.eq.s32.totalorder %s28, 1
      %p79 = por %p77, %p78
      %p80 = scmp.ne.s32.totalorder %s71, %s72
      %p81 = scmp.eq.s32.totalorder %s28, 0
      %p82 = por %p80, %p81
      %p83 = scmp.ne.s32.totalorder %s71, %s72
      %p84 = scmp.eq.s32.totalorder %s29, 1
      %p85 = por %p83, %p84
      %p87 = scmp.ne.s32.totalorder %s72, %s86
      %p88 = scmp.eq.s32.totalorder %s29, 0
      %p89 = por %p87, %p88
      %s91 = sadd.s32 %s90, 1
      %p94 = scmp.eq.s32.totalorder %s23, 1
      %p95 = scmp.ne.s32.totalorder %s90, %s92
      %p96 = scmp.eq.s32.totalorder %s23, 0
      %p97 = por %p95, %p96
      %p98 = scmp.ne.s32.totalorder %s90, %s92
      %p99 = scmp.eq.s32.totalorder %s28, 1
      %p100 = por %p98, %p99
      %p101 = scmp.ne.s32.totalorder %s92, %s93
      %p102 = scmp.eq.s32.totalorder %s28, 0
      %p103 = por %p101, %p102
      %p104 = scmp.ne.s32.totalorder %s92, %s93
      %p105 = scmp.eq.s32.totalorder %s29, 1
      %p106 = por %p104, %p105
      %p108 = scmp.ne.s32.totalorder %s93, %s107
      %p109 = scmp.eq.s32.totalorder %s29, 0
      %p110 = por %p108, %p109
      %s112 = sadd.s32 %s111, 1
      %p115 = scmp.eq.s32.totalorder %s23, 1
      %p116 = scmp.ne.s32.totalorder %s111, %s113
      %p117 = scmp.eq.s32.totalorder %s23, 0
      %p118 = por %p116, %p117
      %p119 = scmp.ne.s32.totalorder %s111, %s113
      %p120 = scmp.eq.s32.totalorder %s28, 1
      %p121 = por %p119, %p120
      %p122 = scmp.ne.s32.totalorder %s113, %s114
      %p123 = scmp.eq.s32.totalorder %s28, 0
      %p124 = por %p122, %p123
      %p125 = scmp.ne.s32.totalorder %s113, %s114
      %p126 = scmp.eq.s32.totalorder %s29, 1
      %p127 = por %p125, %p126
      %p129 = scmp.ne.s32.totalorder %s114, %s128
      %p130 = scmp.eq.s32.totalorder %s29, 0
      %p131 = por %p129, %p130
      %s133 = sadd.s32 %s132, 1
      %p136 = scmp.eq.s32.totalorder %s23, 1
      %p137 = scmp.ne.s32.totalorder %s132, %s134
      %p138 = scmp.eq.s32.totalorder %s23, 0
      %p139 = por %p137, %p138
      %p140 = scmp.ne.s32.totalorder %s132, %s134
      %p141 = scmp.eq.s32.totalorder %s28, 1
      %p142 = por %p140, %p141
      %p143 = scmp.ne.s32.totalorder %s134, %s135
      %p144 = scmp.eq.s32.totalorder %s28, 0
      %p145 = por %p143, %p144
      %p146 = scmp.ne.s32.totalorder %s134, %s135
      %p147 = scmp.eq.s32.totalorder %s29, 1
      %p148 = por %p146, %p147
      %p150 = scmp.ne.s32.totalorder %s135, %s149
      %p151 = scmp.eq.s32.totalorder %s29, 0
      %p152 = por %p150, %p151
      %s154 = sadd.s32 %s153, 1
      %p157 = scmp.eq.s32.totalorder %s23, 1
      %p158 = scmp.ne.s32.totalorder %s153, %s155
      %p159 = scmp.eq.s32.totalorder %s23, 0
      %p160 = por %p158, %p159
      %p161 = scmp.ne.s32.totalorder %s153, %s155
      %p162 = scmp.eq.s32.totalorder %s28, 1
      %p163 = por %p161, %p162
      %p164 = scmp.ne.s32.totalorder %s155, %s156
      %p165 = scmp.eq.s32.totalorder %s28, 0
      %p166 = por %p164, %p165
      %p167 = scmp.ne.s32.totalorder %s155, %s156
      %p168 = scmp.eq.s32.totalorder %s29, 1
      %p169 = por %p167, %p168
      %p171 = scmp.ne.s32.totalorder %s156, %s170
      %p172 = scmp.eq.s32.totalorder %s29, 0
      %p173 = por %p171, %p172
      %s175 = sadd.s32 %s174, 1
      %p178 = scmp.eq.s32.totalorder %s23, 1
      %p179 = scmp.ne.s32.totalorder %s174, %s176
      %p180 = scmp.eq.s32.totalorder %s23, 0
      %p181 = por %p179, %p180
      %p182 = scmp.ne.s32.totalorder %s174, %s176
      %p183 = scmp.eq.s32.totalorder %s28, 1
      %p184 = por %p182, %p183
      %p185 = scmp.ne.s32.totalorder %s176, %s177
      %p186 = scmp.eq.s32.totalorder %s28, 0
      %p187 = por %p185, %p186
      %p188 = scmp.ne.s32.totalorder %s176, %s177
      %p189 = scmp.eq.s32.totalorder %s29, 1
      %p190 = por %p188, %p189
      %p192 = scmp.ne.s32.totalorder %s177, %s191
      %p193 = scmp.eq.s32.totalorder %s29, 0
      %p194 = por %p192, %p193
      %s195 = ssub.s32 %s31, %s38
      %p196 = scmp.eq.s32.totalorder %s195, 0
      %s198 = sadd.s32 %s197, 1
      %s199 = scalar_select %p196, %s197, %s198
      %p202 = pneg %p196
      %p203 = scmp.eq.s32.totalorder %s23, 1
      %p204 = por %p202, %p203
      %p205 = scmp.ne.s32.totalorder %s197, %s200
      %p206 = scmp.eq.s32.totalorder %s23, 0
      %p207 = por %p205, %p206
      %p208 = scmp.ne.s32.totalorder %s197, %s200
      %p209 = scmp.eq.s32.totalorder %s28, 1
      %p210 = por %p208, %p209
      %p211 = scmp.ne.s32.totalorder %s200, %s201
      %p212 = scmp.eq.s32.totalorder %s28, 0
      %p213 = por %p211, %p212
      %p214 = scmp.ne.s32.totalorder %s200, %s201
      %p215 = scmp.eq.s32.totalorder %s29, 1
      %p216 = por %p214, %p215
      %p218 = scmp.ne.s32.totalorder %s201, %s217
      %p219 = scmp.eq.s32.totalorder %s29, 0
      %p220 = por %p218, %p219
      %s221 = ssub.s32 %s31, %s38
      %p222 = scmp.eq.s32.totalorder %s221, 0
      %s224 = sadd.s32 %s223, 1
      %s225 = scalar_select %p222, %s223, %s224
      %p228 = pneg %p222
      %p229 = scmp.eq.s32.totalorder %s23, 1
      %p230 = por %p228, %p229
      %p231 = scmp.ne.s32.totalorder %s223, %s226
      %p232 = scmp.eq.s32.totalorder %s23, 0
      %p233 = por %p231, %p232
      %p234 = scmp.ne.s32.totalorder %s223, %s226
      %p235 = scmp.eq.s32.totalorder %s28, 1
      %p236 = por %p234, %p235
      %p237 = scmp.ne.s32.totalorder %s226, %s227
      %p238 = scmp.eq.s32.totalorder %s28, 0
      %p239 = por %p237, %p238
      %p240 = scmp.ne.s32.totalorder %s226, %s227
      %p241 = scmp.eq.s32.totalorder %s29, 1
      %p242 = por %p240, %p241
      %p244 = scmp.ne.s32.totalorder %s227, %s243
      %p245 = scmp.eq.s32.totalorder %s29, 0
      %p246 = por %p244, %p245
      %s247 = ssub.s32 %s30, %s42
      %s248 = ssub.s32 %s31, %s38
      %s249 = sor.u32 %s247, %s248
      %p250 = scmp.eq.s32.totalorder %s249, 0
      %s252 = sadd.s32 %s251, 1
      %s253 = scalar_select %p250, %s251, %s252
      %p256 = pneg %p250
      %p257 = scmp.eq.s32.totalorder %s23, 1
      %p258 = por %p256, %p257
      %p259 = scmp.ne.s32.totalorder %s251, %s254
      %p260 = scmp.eq.s32.totalorder %s23, 0
      %p261 = por %p259, %p260
      %p262 = scmp.ne.s32.totalorder %s251, %s254
      %p263 = scmp.eq.s32.totalorder %s28, 1
      %p264 = por %p262, %p263
      %p265 = scmp.ne.s32.totalorder %s254, %s255
      %p266 = scmp.eq.s32.totalorder %s28, 0
      %p267 = por %p265, %p266
      %p268 = scmp.ne.s32.totalorder %s254, %s255
      %p269 = scmp.eq.s32.totalorder %s29, 1
      %p270 = por %p268, %p269
      %p272 = scmp.ne.s32.totalorder %s255, %s271
      %p273 = scmp.eq.s32.totalorder %s29, 0
      %p274 = por %p272, %p273
      %p275 = scmp.le.s32.totalorder 1, %s23
      %p276 = scmp.lt.s32.totalorder %s23, 3
      %p277 = pnand %p275, %p276
      %p278 = pneg %p277
      // Predicated region
      $region9: #{tpu_custom_call.1} parent=5 // pred_check
        _
      $region10: #{tpu_custom_call.1} parent=5 // pred_check_branch
        %280 = sbr.rel (%p277) target = $region12
      $region11: #{tpu_custom_call.1} parent=5 // pred_region
        %s281 = ssub.s32 %s23, 1
        // Predicated region
        $region13: #{tpu_custom_call.1} parent=11 // pred_check
          %p282 = pneg %p82
        $region14: #{tpu_custom_call.1} parent=11 // pred_check_branch
          %284 = sbr.rel (%p282) target = $region16
        $region15: #{tpu_custom_call.1} parent=11 // pred_region
          %s286 = ssub.s32 4096, 4096
          %287 = vsyncadd [#allocation7], %s286
          %s288 = sshll.u32 [#allocation6], 4
          %s289 = int_to_ptr.vmem [resolvable:$true] %s288
          %294 = dma.hbm_to_vmem [thread:$0]  %s1, 4096, %s289, [#allocation7], 128, 128, 8
        $region16: #{tpu_custom_call.1} parent=11 // pred_fallthru
          _
        // Predicated region
        $region17: #{tpu_custom_call.1} parent=11 // pred_check
          %p295 = pneg %p103
        $region18: #{tpu_custom_call.1} parent=11 // pred_check_branch
          %297 = sbr.rel (%p295) target = $region20
        $region19: #{tpu_custom_call.1} parent=11 // pred_region
          _
        $region20: #{tpu_custom_call.1} parent=11 // pred_fallthru
          _
        // Predicated region
        $region21: #{tpu_custom_call.1} parent=11 // pred_check
          %p298 = pneg %p124
        $region22: #{tpu_custom_call.1} parent=11 // pred_check_branch
          %300 = sbr.rel (%p298) target = $region24
        $region23: #{tpu_custom_call.1} parent=11 // pred_region
          %s302 = ssub.s32 2048, 2048
          %303 = vsyncadd [#allocation7], %s302
          %s304 = sshll.u32 [#allocation8], 4
          %s305 = int_to_ptr.vmem [resolvable:$true] %s304
          %310 = dma.hbm_to_vmem [thread:$0]  %s3, 2048, %s305, [#allocation7], 128, 128, 8
        $region24: #{tpu_custom_call.1} parent=11 // pred_fallthru
          _
        // Predicated region
        $region25: #{tpu_custom_call.1} parent=11 // pred_check
          %p311 = pneg %p145
        $region26: #{tpu_custom_call.1} parent=11 // pred_check_branch
          %313 = sbr.rel (%p311) target = $region28
        $region27: #{tpu_custom_call.1} parent=11 // pred_region
          _
        $region28: #{tpu_custom_call.1} parent=11 // pred_fallthru
          _
        // Predicated region
        $region29: #{tpu_custom_call.1} parent=11 // pred_check
          %p314 = pneg %p166
        $region30: #{tpu_custom_call.1} parent=11 // pred_check_branch
          %316 = sbr.rel (%p314) target = $region32
        $region31: #{tpu_custom_call.1} parent=11 // pred_region
          %s318 = ssub.s32 2048, 2048
          %319 = vsyncadd [#allocation10], %s318
          %s320 = sshll.u32 [#allocation9], 4
          %s321 = int_to_ptr.vmem [resolvable:$true] %s320
          %326 = dma.hbm_to_vmem [thread:$0]  %s5, 2048, %s321, [#allocation10], 128, 128, 8
        $region32: #{tpu_custom_call.1} parent=11 // pred_fallthru
          _
        // Predicated region
        $region33: #{tpu_custom_call.1} parent=11 // pred_check
          %p327 = pneg %p187
        $region34: #{tpu_custom_call.1} parent=11 // pred_check_branch
          %329 = sbr.rel (%p327) target = $region36
        $region35: #{tpu_custom_call.1} parent=11 // pred_region
          _
        $region36: #{tpu_custom_call.1} parent=11 // pred_fallthru
          _
        // Predicated region
        $region37: #{tpu_custom_call.1} parent=11 // pred_check
          %p330 = pneg %p213
        $region38: #{tpu_custom_call.1} parent=11 // pred_check_branch
          %332 = sbr.rel (%p330) target = $region40
        $region39: #{tpu_custom_call.1} parent=11 // pred_region
          %s334 = ssub.s32 2048, 2048
          %335 = vsyncadd [#allocation10], %s334
          %s336 = smul.addr %s33, 128
          %s337 = scalar_lea.hbm %s7, %s336
          %s338 = sshll.u32 [#allocation11], 4
          %s339 = int_to_ptr.vmem [resolvable:$true] %s338
          %344 = dma.hbm_to_vmem [thread:$0]  %s337, 2048, %s339, [#allocation10], 128, 128, 8
        $region40: #{tpu_custom_call.1} parent=11 // pred_fallthru
          _
        // Predicated region
        $region41: #{tpu_custom_call.1} parent=11 // pred_check
          %p345 = pneg %p239
        $region42: #{tpu_custom_call.1} parent=11 // pred_check_branch
          %347 = sbr.rel (%p345) target = $region44
        $region43: #{tpu_custom_call.1} parent=11 // pred_region
          %p348 = scmp.lt.s32.totalorder %s33, 0
          %s349 = scalar_select %p348, %s33, 0
          %s350 = scalar_lea.vmem %s8, %s349
        $region44: #{tpu_custom_call.1} parent=11 // pred_fallthru
          _
      $region12: #{tpu_custom_call.1} parent=5 // pred_fallthru
        _
      %p351 = scmp.lt.s32.totalorder %s23, 2
      // Predicated region
      $region45: #{tpu_custom_call.1} parent=5 // pred_check
        %p352 = pneg %p351
      $region46: #{tpu_custom_call.1} parent=5 // pred_check_branch
        %354 = sbr.rel (%p352) target = $region48
      $region47: #{tpu_custom_call.1} parent=5 // pred_region
        // Predicated region
        $region49: #{tpu_custom_call.1} parent=47 // pred_check
          %p355 = pneg %p55
        $region50: #{tpu_custom_call.1} parent=47 // pred_check_branch
          %357 = sbr.rel (%p355) target = $region52
        $region51: #{tpu_custom_call.1} parent=47 // pred_region
          %s358 = sand.u32 %s45, 1
          %s359 = scalar_lea.sflag [#allocation4], %s358
          %s360 = sand.u32 %s45, 1
          %s361 = smul.addr %s360, 32
          %s362 = scalar_lea.vmem [#allocation3], %s361
          %s363 = smul.u32 2, %s30
          %s365 = ssub.s32 512, 512
          %366 = vsyncadd %s359, %s365
          %s367 = smul.addr %s363, 2
          %s368 = smul.addr %s367, 128
          %s369 = scalar_lea.hbm %s0, %s368
          %s370 = sshll.u32 %s362, 4
          %s371 = int_to_ptr.vmem [resolvable:$true] %s370
          %376 = dma.hbm_to_vmem [thread:$0]  %s369, 512, %s371, %s359, 256, 256, 16
        $region52: #{tpu_custom_call.1} parent=47 // pred_fallthru
          _
      $region48: #{tpu_custom_call.1} parent=5 // pred_fallthru
        _
      %p377 = scmp.le.s32.totalorder 1, %s23
      %p378 = scmp.lt.s32.totalorder %s23, 3
      %p379 = pnand %p377, %p378
      %p380 = pneg %p379
      // Predicated region
      $region53: #{tpu_custom_call.1} parent=5 // pred_check
        _
      $region54: #{tpu_custom_call.1} parent=5 // pred_check_branch
        %382 = sbr.rel (%p379) target = $region56
      $region55: #{tpu_custom_call.1} parent=5 // pred_region
        %s383 = ssub.s32 %s23, 1
        %s384 = sand.u32 %s48, 1
        %s385 = scalar_lea.sflag [#allocation4], %s384
        %s386 = sand.u32 %s48, 1
        %s387 = smul.addr %s386, 32
        %s388 = scalar_lea.vmem [#allocation3], %s387
        // Predicated region
        $region57: #{tpu_custom_call.1} parent=55 // pred_check
          %p389 = pneg %p61
        $region58: #{tpu_custom_call.1} parent=55 // pred_check_branch
          %391 = sbr.rel (%p389) target = $region60
        $region59: #{tpu_custom_call.1} parent=55 // pred_region
          %392 = dma.done %s385, 512
        $region60: #{tpu_custom_call.1} parent=55 // pred_fallthru
          _
        // Predicated region
        $region61: #{tpu_custom_call.1} parent=55 // pred_check
          %p393 = pneg %p82
        $region62: #{tpu_custom_call.1} parent=55 // pred_check_branch
          %395 = sbr.rel (%p393) target = $region64
        $region63: #{tpu_custom_call.1} parent=55 // pred_region
          %396 = dma.done [#allocation7], 4096
        $region64: #{tpu_custom_call.1} parent=55 // pred_fallthru
          _
        // Predicated region
        $region65: #{tpu_custom_call.1} parent=55 // pred_check
          %p397 = pneg %p124
        $region66: #{tpu_custom_call.1} parent=55 // pred_check_branch
          %399 = sbr.rel (%p397) target = $region68
        $region67: #{tpu_custom_call.1} parent=55 // pred_region
          %400 = dma.done [#allocation7], 2048
        $region68: #{tpu_custom_call.1} parent=55 // pred_fallthru
          _
        // Predicated region
        $region69: #{tpu_custom_call.1} parent=55 // pred_check
          %p401 = pneg %p166
        $region70: #{tpu_custom_call.1} parent=55 // pred_check_branch
          %403 = sbr.rel (%p401) target = $region72
        $region71: #{tpu_custom_call.1} parent=55 // pred_region
          %404 = dma.done [#allocation10], 2048
        $region72: #{tpu_custom_call.1} parent=55 // pred_fallthru
          _
        // Predicated region
        $region73: #{tpu_custom_call.1} parent=55 // pred_check
          %p405 = pneg %p213
        $region74: #{tpu_custom_call.1} parent=55 // pred_check_branch
          %407 = sbr.rel (%p405) target = $region76
        $region75: #{tpu_custom_call.1} parent=55 // pred_region
          %408 = dma.done [#allocation10], 2048
        $region76: #{tpu_custom_call.1} parent=55 // pred_fallthru
          _
        %s409 = sand.u32 %s48, 1
        %s410 = scalar_lea.sflag [#allocation4], %s409
        %s411 = sand.u32 %s48, 1
        %s412 = smul.addr %s411, 32
        %s413 = scalar_lea.vmem [#allocation3], %s412
        %p414 = pneg %p61
        %p415 = pneg %p58
        %p416 = pneg %p82
        %p417 = pneg %p79
        %p418 = pneg %p103
        %p419 = pneg %p100
        %p420 = pneg %p124
        %p421 = pneg %p121
        %p422 = pneg %p145
        %p423 = pneg %p142
        %p424 = pneg %p166
        %p425 = pneg %p163
        %p426 = pneg %p187
        %p427 = pneg %p184
        %p428 = pneg %p213
        %p429 = pneg %p210
        %p430 = scmp.lt.s32.totalorder %s33, 0
        %s431 = scalar_select %p430, %s33, 0
        %s432 = scalar_lea.vmem %s8, %s431
        %p433 = pneg %p239
        %p434 = pneg %p236
        %p435 = pneg %p267
        %p436 = pneg %p264
        %s437 = sand.u32 %s254, 1
        %s438 = scalar_lea.sflag [#allocation5], %s437
        %s439 = sand.u32 %s254, 1
        %s440 = smul.addr %s439, 16
        %s441 = scalar_lea.vmem [#allocation12], %s440
        %s442 = smul.u32 2, %s32
        %p443 = scmp.lt.s32.totalorder %s33, 0
        %s444 = scalar_select %p443, %s33, 0
        %s445 = scalar_lea.vmem %s8, %s444
        %s446 = smul.u32 2, %s32
        %p447 = scmp.eq.s32.totalorder %s33, 0
        // Predicated region
        $region77: #{tpu_custom_call.1} parent=55 // pred_check
          %p448 = pneg %p447
        $region78: #{tpu_custom_call.1} parent=55 // pred_check_branch
          %450 = sbr.rel (%p448) target = $region80
        $region79: #{tpu_custom_call.1} parent=55 // pred_region
          %v451 = vld [vmem:[%s388] sm:$0xff]
          %v452 = vld [vmem:[%s388 + $0x8] sm:$0xff]
          %v453 = vld [vmem:[%s388 + $0x10] sm:$0xff]
          %v454 = vld [vmem:[%s388 + $0x18] sm:$0xff]
          %v455 = vld [vmem:[#allocation6] sm:$0xff]
          %v456 = vld [vmem:[#allocation6 + $0x8] sm:$0xff]
          %v457 = vld [vmem:[#allocation6 + $0x10] sm:$0xff]
          %v458 = vld [vmem:[#allocation6 + $0x18] sm:$0xff]
          %v459 = vld [vmem:[#allocation6 + $0x20] sm:$0xff]
          %v460 = vld [vmem:[#allocation6 + $0x28] sm:$0xff]
          %v461 = vld [vmem:[#allocation6 + $0x30] sm:$0xff]
          %v462 = vld [vmem:[#allocation6 + $0x38] sm:$0xff]
          %v463 = vld [vmem:[#allocation6 + $0x40] sm:$0xff]
          %v464 = vld [vmem:[#allocation6 + $0x48] sm:$0xff]
          %v465 = vld [vmem:[#allocation6 + $0x50] sm:$0xff]
          %v466 = vld [vmem:[#allocation6 + $0x58] sm:$0xff]
          %v467 = vld [vmem:[#allocation6 + $0x60] sm:$0xff]
          %v468 = vld [vmem:[#allocation6 + $0x68] sm:$0xff]
          %v469 = vld [vmem:[#allocation6 + $0x70] sm:$0xff]
          %v470 = vld [vmem:[#allocation6 + $0x78] sm:$0xff]
          %v471 = vld [vmem:[#allocation6 + $0x80] sm:$0xff]
          %v472 = vld [vmem:[#allocation6 + $0x88] sm:$0xff]
          %v473 = vld [vmem:[#allocation6 + $0x90] sm:$0xff]
          %v474 = vld [vmem:[#allocation6 + $0x98] sm:$0xff]
          %v475 = vld [vmem:[#allocation6 + $0xa0] sm:$0xff]
          %v476 = vld [vmem:[#allocation6 + $0xa8] sm:$0xff]
          %v477 = vld [vmem:[#allocation6 + $0xb0] sm:$0xff]
          %v478 = vld [vmem:[#allocation6 + $0xb8] sm:$0xff]
          %v479 = vld [vmem:[#allocation6 + $0xc0] sm:$0xff]
          %v480 = vld [vmem:[#allocation6 + $0xc8] sm:$0xff]
          %v481 = vld [vmem:[#allocation6 + $0xd0] sm:$0xff]
          %v482 = vld [vmem:[#allocation6 + $0xd8] sm:$0xff]
          %v483 = vld [vmem:[#allocation6 + $0xe0] sm:$0xff]
          %v484 = vld [vmem:[#allocation6 + $0xe8] sm:$0xff]
          %v485 = vld [vmem:[#allocation6 + $0xf0] sm:$0xff]
          %v486 = vld [vmem:[#allocation6 + $0xf8] sm:$0xff]
          %v487 = vld [vmem:[%s2] sm:$0x1]
          %v489 = vlaneseq
          %v490 = vshrl.u32 %v489, 7
          %v491 = vsub.s32 0, %v490
          %v492 = vrot.slane %v487, %v491
          %494 = vmatprep.subr.mxu0 0.0
          %495 = vmatpush1.msra.mxu0 %v455
          %496 = vmatprep.subr.mxu0 0.0
          %497 = vmatpush1.msra.mxu0 %v456
          %498 = vmatprep.subr.mxu0 0.0
          %499 = vmatpush1.msra.mxu0 %v457
          %500 = vmatprep.subr.mxu0 0.0
          %501 = vmatpush1.msra.mxu0 %v458
          %502 = vmatprep.subr.mxu0 0.0
          %503 = vmatpush1.msra.mxu0 %v459
          %504 = vmatprep.subr.mxu0 0.0
          %505 = vmatpush1.msra.mxu0 %v460
          %506 = vmatprep.subr.mxu0 0.0
          %507 = vmatpush1.msra.mxu0 %v461
          %508 = vmatprep.subr.mxu0 0.0
          %509 = vmatpush1.msra.mxu0 %v462
          %510 = vmatprep.subr.mxu0 0.0
          %511 = vmatpush1.msra.mxu0 %v463
          %512 = vmatprep.subr.mxu0 0.0
          %513 = vmatpush1.msra.mxu0 %v464
          %514 = vmatprep.subr.mxu0 0.0
          %515 = vmatpush1.msra.mxu0 %v465
          %516 = vmatprep.subr.mxu0 0.0
          %517 = vmatpush1.msra.mxu0 %v466
          %518 = vmatprep.subr.mxu0 0.0
          %519 = vmatpush1.msra.mxu0 %v467
          %520 = vmatprep.subr.mxu0 0.0
          %521 = vmatpush1.msra.mxu0 %v468
          %522 = vmatprep.subr.mxu0 0.0
          %523 = vmatpush1.msra.mxu0 %v469
          %524 = vmatprep.subr.mxu0 0.0
          %525 = vmatpush1.msra.mxu0 %v470
          %526 = vmatprep.subr.mxu0 0.0
          %527 = vmatpush1.msra.mxu0 %v471
          %528 = vmatprep.subr.mxu0 0.0
          %529 = vmatpush1.msra.mxu0 %v472
          %530 = vmatprep.subr.mxu0 0.0
          %531 = vmatpush1.msra.mxu0 %v473
          %532 = vmatprep.subr.mxu0 0.0
          %533 = vmatpush1.msra.mxu0 %v474
          %534 = vmatprep.subr.mxu0 0.0
          %535 = vmatpush1.msra.mxu0 %v475
          %536 = vmatprep.subr.mxu0 0.0
          %537 = vmatpush1.msra.mxu0 %v476
          %538 = vmatprep.subr.mxu0 0.0
          %539 = vmatpush1.msra.mxu0 %v477
          %540 = vmatprep.subr.mxu0 0.0
          %541 = vmatpush1.msra.mxu0 %v478
          %542 = vmatprep.subr.mxu0 0.0
          %543 = vmatpush1.msra.mxu0 %v479
          %544 = vmatprep.subr.mxu0 0.0
          %545 = vmatpush1.msra.mxu0 %v480
          %546 = vmatprep.subr.mxu0 0.0
          %547 = vmatpush1.msra.mxu0 %v481
          %548 = vmatprep.subr.mxu0 0.0
          %549 = vmatpush1.msra.mxu0 %v482
          %550 = vmatprep.subr.mxu0 0.0
          %551 = vmatpush1.msra.mxu0 %v483
          %552 = vmatprep.subr.mxu0 0.0
          %553 = vmatpush1.msra.mxu0 %v484
          %554 = vmatprep.subr.mxu0 0.0
          %555 = vmatpush1.msra.mxu0 %v485
          %556 = vmatprep.subr.mxu0 0.0
          %557 = vmatpush1.msra.mxu0 %v486
          %558 = vmatprep.mubr.f32.mxu0 %v452
          %559 = vmatmul.mubr.f32.gmra.mrb[0].mxu0 %v451
          %v560 = vpop.f32.mrb[0].mxu0
          %v561 = vadd.f32 %v492, %v560
          %v562 = vpop.f32.mrb[0].mxu0
          %563 = vmatprep.mubr.f32.mxu0 %v454
          %564 = vmatmul.mubr.f32.gmra.mrb[0].mxu0 %v453
          %v565 = vpop.f32.mrb[0].mxu0
          %v566 = vadd.f32 %v492, %v565
          %v567 = vpop.f32.mrb[0].mxu0
          %568 = vdwg.mxu0
          %v569 = vmax.f32 %v561, 0.0
          %v570 = vmax.f32 %v566, 0.0
          %v571 = vld [vmem:[#allocation8] sm:$0xff]
          %v572 = vld [vmem:[#allocation8 + $0x8] sm:$0xff]
          %v573 = vld [vmem:[#allocation8 + $0x10] sm:$0xff]
          %v574 = vld [vmem:[#allocation8 + $0x18] sm:$0xff]
          %v575 = vld [vmem:[#allocation8 + $0x20] sm:$0xff]
          %v576 = vld [vmem:[#allocation8 + $0x28] sm:$0xff]
          %v577 = vld [vmem:[#allocation8 + $0x30] sm:$0xff]
          %v578 = vld [vmem:[#allocation8 + $0x38] sm:$0xff]
          %v579 = vld [vmem:[#allocation8 + $0x40] sm:$0xff]
          %v580 = vld [vmem:[#allocation8 + $0x48] sm:$0xff]
          %v581 = vld [vmem:[#allocation8 + $0x50] sm:$0xff]
          %v582 = vld [vmem:[#allocation8 + $0x58] sm:$0xff]
          %v583 = vld [vmem:[#allocation8 + $0x60] sm:$0xff]
          %v584 = vld [vmem:[#allocation8 + $0x68] sm:$0xff]
          %v585 = vld [vmem:[#allocation8 + $0x70] sm:$0xff]
          %v586 = vld [vmem:[#allocation8 + $0x78] sm:$0xff]
          %v587 = vld [vmem:[%s4] sm:$0x1]
          %v589 = vlaneseq
          %v590 = vshrl.u32 %v589, 7
          %v591 = vsub.s32 0, %v590
          %v592 = vrot.slane %v587, %v591
          %594 = vmatprep.subr.mxu0 0.0
          %595 = vmatpush1.msra.mxu0 %v571
          %596 = vmatprep.subr.mxu0 0.0
          %597 = vmatpush1.msra.mxu0 %v572
          %598 = vmatprep.subr.mxu0 0.0
          %599 = vmatpush1.msra.mxu0 %v573
          %600 = vmatprep.subr.mxu0 0.0
          %601 = vmatpush1.msra.mxu0 %v574
          %602 = vmatprep.subr.mxu0 0.0
          %603 = vmatpush1.msra.mxu0 %v575
          %604 = vmatprep.subr.mxu0 0.0
          %605 = vmatpush1.msra.mxu0 %v576
          %606 = vmatprep.subr.mxu0 0.0
          %607 = vmatpush1.msra.mxu0 %v577
          %608 = vmatprep.subr.mxu0 0.0
          %609 = vmatpush1.msra.mxu0 %v578
          %610 = vmatprep.subr.mxu0 0.0
          %611 = vmatpush1.msra.mxu0 %v579
          %612 = vmatprep.subr.mxu0 0.0
          %613 = vmatpush1.msra.mxu0 %v580
          %614 = vmatprep.subr.mxu0 0.0
          %615 = vmatpush1.msra.mxu0 %v581
          %616 = vmatprep.subr.mxu0 0.0
          %617 = vmatpush1.msra.mxu0 %v582
          %618 = vmatprep.subr.mxu0 0.0
          %619 = vmatpush1.msra.mxu0 %v583
          %620 = vmatprep.subr.mxu0 0.0
          %621 = vmatpush1.msra.mxu0 %v584
          %622 = vmatprep.subr.mxu0 0.0
          %623 = vmatpush1.msra.mxu0 %v585
          %624 = vmatprep.subr.mxu0 0.0
          %625 = vmatpush1.msra.mxu0 %v586
          %626 = vmatprep.subr.mxu0 0.0
          %627 = vmatpush1.msra.mxu0 0.0
          %628 = vmatprep.subr.mxu0 0.0
          %629 = vmatpush1.msra.mxu0 0.0
          %630 = vmatprep.subr.mxu0 0.0
          %631 = vmatpush1.msra.mxu0 0.0
          %632 = vmatprep.subr.mxu0 0.0
          %633 = vmatpush1.msra.mxu0 0.0
          %634 = vmatprep.subr.mxu0 0.0
          %635 = vmatpush1.msra.mxu0 0.0
          %636 = vmatprep.subr.mxu0 0.0
          %637 = vmatpush1.msra.mxu0 0.0
          %638 = vmatprep.subr.mxu0 0.0
          %639 = vmatpush1.msra.mxu0 0.0
          %640 = vmatprep.subr.mxu0 0.0
          %641 = vmatpush1.msra.mxu0 0.0
          %642 = vmatprep.subr.mxu0 0.0
          %643 = vmatpush1.msra.mxu0 0.0
          %644 = vmatprep.subr.mxu0 0.0
          %645 = vmatpush1.msra.mxu0 0.0
          %646 = vmatprep.subr.mxu0 0.0
          %647 = vmatpush1.msra.mxu0 0.0
          %648 = vmatprep.subr.mxu0 0.0
          %649 = vmatpush1.msra.mxu0 0.0
          %650 = vmatprep.subr.mxu0 0.0
          %651 = vmatpush1.msra.mxu0 0.0
          %652 = vmatprep.subr.mxu0 0.0
          %653 = vmatpush1.msra.mxu0 0.0
          %654 = vmatprep.subr.mxu0 0.0
          %655 = vmatpush1.msra.mxu0 0.0
          %656 = vmatprep.subr.mxu0 0.0
          %657 = vmatpush1.msra.mxu0 0.0
          %658 = vmatprep.mubr.f32.mxu0 0.0
          %659 = vmatmul.mubr.f32.gmra.mrb[0].mxu0 %v569
          %v660 = vpop.f32.mrb[0].mxu0
          %v661 = vadd.f32 %v592, %v660
          %v662 = vpop.f32.mrb[0].mxu0
          %663 = vmatprep.mubr.f32.mxu0 0.0
          %664 = vmatmul.mubr.f32.gmra.mrb[0].mxu0 %v570
          %v665 = vpop.f32.mrb[0].mxu0
          %v666 = vadd.f32 %v592, %v665
          %v667 = vpop.f32.mrb[0].mxu0
          %668 = vdwg.mxu0
          %v669 = vmax.f32 %v661, 0.0
          %v670 = vmax.f32 %v666, 0.0
          %v671 = vld [vmem:[#allocation9] sm:$0xff]
          %v672 = vld [vmem:[#allocation9 + $0x8] sm:$0xff]
          %v673 = vld [vmem:[#allocation9 + $0x10] sm:$0xff]
          %v674 = vld [vmem:[#allocation9 + $0x18] sm:$0xff]
          %v675 = vld [vmem:[#allocation9 + $0x20] sm:$0xff]
          %v676 = vld [vmem:[#allocation9 + $0x28] sm:$0xff]
          %v677 = vld [vmem:[#allocation9 + $0x30] sm:$0xff]
          %v678 = vld [vmem:[#allocation9 + $0x38] sm:$0xff]
          %v679 = vld [vmem:[#allocation9 + $0x40] sm:$0xff]
          %v680 = vld [vmem:[#allocation9 + $0x48] sm:$0xff]
          %v681 = vld [vmem:[#allocation9 + $0x50] sm:$0xff]
          %v682 = vld [vmem:[#allocation9 + $0x58] sm:$0xff]
          %v683 = vld [vmem:[#allocation9 + $0x60] sm:$0xff]
          %v684 = vld [vmem:[#allocation9 + $0x68] sm:$0xff]
          %v685 = vld [vmem:[#allocation9 + $0x70] sm:$0xff]
          %v686 = vld [vmem:[#allocation9 + $0x78] sm:$0xff]
          %v687 = vld [vmem:[%s6] sm:$0x1]
          %v689 = vlaneseq
          %v690 = vshrl.u32 %v689, 7
          %v691 = vsub.s32 0, %v690
          %v692 = vrot.slane %v687, %v691
          %694 = vmatprep.subr.mxu0 0.0
          %695 = vmatpush1.msra.mxu0 %v671
          %696 = vmatprep.subr.mxu0 0.0
          %697 = vmatpush1.msra.mxu0 %v672
          %698 = vmatprep.subr.mxu0 0.0
          %699 = vmatpush1.msra.mxu0 %v673
          %700 = vmatprep.subr.mxu0 0.0
          %701 = vmatpush1.msra.mxu0 %v674
          %702 = vmatprep.subr.mxu0 0.0
          %703 = vmatpush1.msra.mxu0 %v675
          %704 = vmatprep.subr.mxu0 0.0
          %705 = vmatpush1.msra.mxu0 %v676
          %706 = vmatprep.subr.mxu0 0.0
          %707 = vmatpush1.msra.mxu0 %v677
          %708 = vmatprep.subr.mxu0 0.0
          %709 = vmatpush1.msra.mxu0 %v678
          %710 = vmatprep.subr.mxu0 0.0
          %711 = vmatpush1.msra.mxu0 %v679
          %712 = vmatprep.subr.mxu0 0.0
          %713 = vmatpush1.msra.mxu0 %v680
          %714 = vmatprep.subr.mxu0 0.0
          %715 = vmatpush1.msra.mxu0 %v681
          %716 = vmatprep.subr.mxu0 0.0
          %717 = vmatpush1.msra.mxu0 %v682
          %718 = vmatprep.subr.mxu0 0.0
          %719 = vmatpush1.msra.mxu0 %v683
          %720 = vmatprep.subr.mxu0 0.0
          %721 = vmatpush1.msra.mxu0 %v684
          %722 = vmatprep.subr.mxu0 0.0
          %723 = vmatpush1.msra.mxu0 %v685
          %724 = vmatprep.subr.mxu0 0.0
          %725 = vmatpush1.msra.mxu0 %v686
          %726 = vmatprep.subr.mxu0 0.0
          %727 = vmatpush1.msra.mxu0 0.0
          %728 = vmatprep.subr.mxu0 0.0
          %729 = vmatpush1.msra.mxu0 0.0
          %730 = vmatprep.subr.mxu0 0.0
          %731 = vmatpush1.msra.mxu0 0.0
          %732 = vmatprep.subr.mxu0 0.0
          %733 = vmatpush1.msra.mxu0 0.0
          %734 = vmatprep.subr.mxu0 0.0
          %735 = vmatpush1.msra.mxu0 0.0
          %736 = vmatprep.subr.mxu0 0.0
          %737 = vmatpush1.msra.mxu0 0.0
          %738 = vmatprep.subr.mxu0 0.0
          %739 = vmatpush1.msra.mxu0 0.0
          %740 = vmatprep.subr.mxu0 0.0
          %741 = vmatpush1.msra.mxu0 0.0
          %742 = vmatprep.subr.mxu0 0.0
          %743 = vmatpush1.msra.mxu0 0.0
          %744 = vmatprep.subr.mxu0 0.0
          %745 = vmatpush1.msra.mxu0 0.0
          %746 = vmatprep.subr.mxu0 0.0
          %747 = vmatpush1.msra.mxu0 0.0
          %748 = vmatprep.subr.mxu0 0.0
          %749 = vmatpush1.msra.mxu0 0.0
          %750 = vmatprep.subr.mxu0 0.0
          %751 = vmatpush1.msra.mxu0 0.0
          %752 = vmatprep.subr.mxu0 0.0
          %753 = vmatpush1.msra.mxu0 0.0
          %754 = vmatprep.subr.mxu0 0.0
          %755 = vmatpush1.msra.mxu0 0.0
          %756 = vmatprep.subr.mxu0 0.0
          %757 = vmatpush1.msra.mxu0 0.0
          %758 = vmatprep.mubr.f32.mxu0 0.0
          %759 = vmatmul.mubr.f32.gmra.mrb[0].mxu0 %v669
          %v760 = vpop.f32.mrb[0].mxu0
          %v761 = vadd.f32 %v692, %v760
          %v762 = vpop.f32.mrb[0].mxu0
          %763 = vmatprep.mubr.f32.mxu0 0.0
          %764 = vmatmul.mubr.f32.gmra.mrb[0].mxu0 %v670
          %v765 = vpop.f32.mrb[0].mxu0
          %v766 = vadd.f32 %v692, %v765
          %v767 = vpop.f32.mrb[0].mxu0
          %768 = vdwg.mxu0
          %v769 = vmax.f32 %v761, 0.0
          %v770 = vmax.f32 %v766, 0.0
          %771 = vst [vmem:[#allocation2] sm:$0xff] %v769
          %772 = vst [vmem:[#allocation2 + $0x8] sm:$0xff] %v770
        $region80: #{tpu_custom_call.1} parent=55 // pred_fallthru
          _
        %v773 = vld [vmem:[#allocation2] sm:$0xff]
        %v774 = vld [vmem:[#allocation2 + $0x8] sm:$0xff]
        %v775 = vld [vmem:[#allocation11] sm:$0xff]
        %v776 = vld [vmem:[#allocation11 + $0x8] sm:$0xff]
        %v777 = vld [vmem:[#allocation11 + $0x10] sm:$0xff]
        %v778 = vld [vmem:[#allocation11 + $0x18] sm:$0xff]
        %v779 = vld [vmem:[#allocation11 + $0x20] sm:$0xff]
        %v780 = vld [vmem:[#allocation11 + $0x28] sm:$0xff]
        %v781 = vld [vmem:[#allocation11 + $0x30] sm:$0xff]
        %v782 = vld [vmem:[#allocation11 + $0x38] sm:$0xff]
        %v783 = vld [vmem:[#allocation11 + $0x40] sm:$0xff]
        %v784 = vld [vmem:[#allocation11 + $0x48] sm:$0xff]
        %v785 = vld [vmem:[#allocation11 + $0x50] sm:$0xff]
        %v786 = vld [vmem:[#allocation11 + $0x58] sm:$0xff]
        %v787 = vld [vmem:[#allocation11 + $0x60] sm:$0xff]
        %v788 = vld [vmem:[#allocation11 + $0x68] sm:$0xff]
        %v789 = vld [vmem:[#allocation11 + $0x70] sm:$0xff]
        %v790 = vld [vmem:[#allocation11 + $0x78] sm:$0xff]
        %v791 = vld [vmem:[%s445] sm:$0x1]
        %v793 = vlaneseq
        %v794 = vshrl.u32 %v793, 7
        %v795 = vsub.s32 0, %v794
        %v796 = vrot.slane %v791, %v795
        %798 = vmatprep.subr.mxu0 0.0
        %799 = vmatpush1.msra.mxu0 %v775
        %800 = vmatprep.subr.mxu0 0.0
        %801 = vmatpush1.msra.mxu0 %v776
        %802 = vmatprep.subr.mxu0 0.0
        %803 = vmatpush1.msra.mxu0 %v777
        %804 = vmatprep.subr.mxu0 0.0
        %805 = vmatpush1.msra.mxu0 %v778
        %806 = vmatprep.subr.mxu0 0.0
        %807 = vmatpush1.msra.mxu0 %v779
        %808 = vmatprep.subr.mxu0 0.0
        %809 = vmatpush1.msra.mxu0 %v780
        %810 = vmatprep.subr.mxu0 0.0
        %811 = vmatpush1.msra.mxu0 %v781
        %812 = vmatprep.subr.mxu0 0.0
        %813 = vmatpush1.msra.mxu0 %v782
        %814 = vmatprep.subr.mxu0 0.0
        %815 = vmatpush1.msra.mxu0 %v783
        %816 = vmatprep.subr.mxu0 0.0
        %817 = vmatpush1.msra.mxu0 %v784
        %818 = vmatprep.subr.mxu0 0.0
        %819 = vmatpush1.msra.mxu0 %v785
        %820 = vmatprep.subr.mxu0 0.0
        %821 = vmatpush1.msra.mxu0 %v786
        %822 = vmatprep.subr.mxu0 0.0
        %823 = vmatpush1.msra.mxu0 %v787
        %824 = vmatprep.subr.mxu0 0.0
        %825 = vmatpush1.msra.mxu0 %v788
        %826 = vmatprep.subr.mxu0 0.0
        %827 = vmatpush1.msra.mxu0 %v789
        %828 = vmatprep.subr.mxu0 0.0
        %829 = vmatpush1.msra.mxu0 %v790
        %830 = vmatprep.subr.mxu0 0.0
        %831 = vmatpush1.msra.mxu0 0.0
        %832 = vmatprep.subr.mxu0 0.0
        %833 = vmatpush1.msra.mxu0 0.0
        %834 = vmatprep.subr.mxu0 0.0
        %835 = vmatpush1.msra.mxu0 0.0
        %836 = vmatprep.subr.mxu0 0.0
        %837 = vmatpush1.msra.mxu0 0.0
        %838 = vmatprep.subr.mxu0 0.0
        %839 = vmatpush1.msra.mxu0 0.0
        %840 = vmatprep.subr.mxu0 0.0
        %841 = vmatpush1.msra.mxu0 0.0
        %842 = vmatprep.subr.mxu0 0.0
        %843 = vmatpush1.msra.mxu0 0.0
        %844 = vmatprep.subr.mxu0 0.0
        %845 = vmatpush1.msra.mxu0 0.0
        %846 = vmatprep.subr.mxu0 0.0
        %847 = vmatpush1.msra.mxu0 0.0
        %848 = vmatprep.subr.mxu0 0.0
        %849 = vmatpush1.msra.mxu0 0.0
        %850 = vmatprep.subr.mxu0 0.0
        %851 = vmatpush1.msra.mxu0 0.0
        %852 = vmatprep.subr.mxu0 0.0
        %853 = vmatpush1.msra.mxu0 0.0
        %854 = vmatprep.subr.mxu0 0.0
        %855 = vmatpush1.msra.mxu0 0.0
        %856 = vmatprep.subr.mxu0 0.0
        %857 = vmatpush1.msra.mxu0 0.0
        %858 = vmatprep.subr.mxu0 0.0
        %859 = vmatpush1.msra.mxu0 0.0
        %860 = vmatprep.subr.mxu0 0.0
        %861 = vmatpush1.msra.mxu0 0.0
        %862 = vmatprep.mubr.f32.mxu0 0.0
        %863 = vmatmul.mubr.f32.gmra.mrb[0].mxu0 %v773
        %v864 = vpop.f32.mrb[0].mxu0
        %v865 = vadd.f32 %v796, %v864
        %v866 = vpop.f32.mrb[0].mxu0
        %867 = vmatprep.mubr.f32.mxu0 0.0
        %868 = vmatmul.mubr.f32.gmra.mrb[0].mxu0 %v774
        %v869 = vpop.f32.mrb[0].mxu0
        %v870 = vadd.f32 %v796, %v869
        %v871 = vpop.f32.mrb[0].mxu0
        %872 = vdwg.mxu0
        %873 = vst [vmem:[%s441] sm:$0xff] %v865
        %874 = vst [vmem:[%s441 + $0x8] sm:$0xff] %v870
        %s875 = sand.u32 %s254, 1
        %s876 = scalar_lea.sflag [#allocation5], %s875
        %s877 = sand.u32 %s254, 1
        %s878 = smul.addr %s877, 16
        %s879 = scalar_lea.vmem [#allocation12], %s878
        // Predicated region
        $region81: #{tpu_custom_call.1} parent=55 // pred_check
          %p880 = pneg %p264
        $region82: #{tpu_custom_call.1} parent=55 // pred_check_branch
          %882 = sbr.rel (%p880) target = $region84
        $region83: #{tpu_custom_call.1} parent=55 // pred_region
          %s883 = smul.u32 2, %s32
          %s885 = ssub.s32 256, 256
          %886 = vsyncadd %s876, %s885
          %s887 = sadd.s32 %s33, %s883
          %s888 = smul.addr %s887, 128
          %s889 = scalar_lea.hbm %s9, %s888
          %s890 = sshll.u32 %s879, 4
          %s891 = int_to_ptr.vmem [resolvable:$true] %s890
          %896 = dma.vmem_to_hbm [thread:$0]  %s891, 256, %s889, %s876, 128, 128, 8
        $region84: #{tpu_custom_call.1} parent=55 // pred_fallthru
          _
      $region56: #{tpu_custom_call.1} parent=5 // pred_fallthru
        _
      %p897 = scmp.le.s32.totalorder 2, %s23
      // Predicated region
      $region85: #{tpu_custom_call.1} parent=5 // pred_check
        %p898 = pneg %p897
      $region86: #{tpu_custom_call.1} parent=5 // pred_check_branch
        %900 = sbr.rel (%p898) target = $region88
      $region87: #{tpu_custom_call.1} parent=5 // pred_region
        %s901 = ssub.s32 %s23, 2
        // Predicated region
        $region89: #{tpu_custom_call.1} parent=87 // pred_check
          %p902 = pneg %p270
        $region90: #{tpu_custom_call.1} parent=87 // pred_check_branch
          %904 = sbr.rel (%p902) target = $region92
        $region91: #{tpu_custom_call.1} parent=87 // pred_region
          %s905 = sand.u32 %s255, 1
          %s906 = scalar_lea.sflag [#allocation5], %s905
          %s907 = sand.u32 %s255, 1
          %s908 = smul.addr %s907, 16
          %s909 = scalar_lea.vmem [#allocation12], %s908
          %910 = dma.done %s906, 256
        $region92: #{tpu_custom_call.1} parent=87 // pred_fallthru
          _
      $region88: #{tpu_custom_call.1} parent=5 // pred_fallthru
        _
    $region6: #{tpu_custom_call.1} parent=1 // loop_footer
      %s27 = sadd.s32 1, %s23
    $region7: #{tpu_custom_call.1} parent=1 // loop_footer_branch
      %22 = sbr.rel target = $region3
    $region8: #{tpu_custom_call.1} parent=1 // loop_exit
      _
    %911 = vsyncpa [#allocation4], 1
    %s912 = scalar_lea.sflag [#allocation4], 1
    %913 = vsyncpa %s912, 1
    %914 = vsyncpa [#allocation7], 1
    %915 = vsyncpa [#allocation10], 1
    %916 = vsyncpa [#allocation5], 1
    %s917 = scalar_lea.sflag [#allocation5], 1
    %918 = vsyncpa %s917, 1

// kernel: tpu_custom_call.1
$region0: #{tpu_custom_call.1}
  #allocation0 [shape = 'u32[]', space=smem, size = 0x4, offset = 0x4, fixed_abs, tag = 'smem constant byte address 0x4 - core index']
  #allocation1 [shape = 'u32[144,128]{1,0:T(1,128)}', space=vmem, size = 0x12000, scoped, tag = 'internal scratch']
  #allocation2 [shape = 'f32[16,128]{1,0:T(8,128)}', space=vmem, size = 0x2000, scoped, tag = 'scratch operand']
  %s0 = inlined_call_operand.hbm [shape: f32[32,256], index: 0, kind: input, shape index: {}]
  %s1 = inlined_call_operand.hbm [shape: f32[256,128], index: 1, kind: input, shape index: {}]
  %s2 = inlined_call_operand.vmem [shape: f32[1,128], index: 2, kind: input, shape index: {}]
  %s3 = inlined_call_operand.hbm [shape: f32[128,128], index: 3, kind: input, shape index: {}]
  %s4 = inlined_call_operand.vmem [shape: f32[1,128], index: 4, kind: input, shape index: {}]
  %s5 = inlined_call_operand.hbm [shape: f32[128,128], index: 5, kind: input, shape index: {}]
  %s6 = inlined_call_operand.vmem [shape: f32[1,128], index: 6, kind: input, shape index: {}]
  %s7 = inlined_call_operand.hbm [shape: f32[128,128], index: 7, kind: input, shape index: {}]
  %s8 = inlined_call_operand.vmem [shape: f32[1,128], index: 8, kind: input, shape index: {}]
  %s9 = inlined_call_operand.hbm [shape: f32[32,128], index: 9, kind: output, shape index: {}]
  %s10 = sld [smem:[#allocation0]]
  $region93: #{tpu_custom_call.1} parent=0
    _
  %s12 = ssub.s32 1, %s10
  %s13 = scalar_select 0, %s12, %s10
  $region1: #{tpu_custom_call.1} parent=0
    #allocation3 [shape = 'u8[32768]{0}', space=vmem, size = 0x8000, scoped, tag = 'input window, operand 0']
    #allocation4 [shape = 's32[2]{0}', space=sflag, size = 0x8, scoped, tag = 'scoped memory for tpu_custom_call.1']
    #allocation5 [shape = 's32[2]{0}', space=sflag, size = 0x8, scoped, tag = 'scoped memory for tpu_custom_call.1']
    #allocation6 [shape = 'u8[131072]{0}', space=vmem, size = 0x20000, scoped, tag = 'input window, operand 1, single buffered']
    #allocation7 [shape = 's32[1]{0}', space=sflag, size = 0x4, scoped, tag = 'scoped memory for tpu_custom_call.1']
    #allocation8 [shape = 'u8[65536]{0}', space=vmem, size = 0x10000, scoped, tag = 'input window, operand 3, single buffered']
    #allocation9 [shape = 'u8[65536]{0}', space=vmem, size = 0x10000, scoped, tag = 'input window, operand 5, single buffered']
    #allocation10 [shape = 's32[1]{0}', space=sflag, size = 0x4, scoped, tag = 'scoped memory for tpu_custom_call.1']
    #allocation11 [shape = 'u8[65536]{0}', space=vmem, size = 0x10000, scoped, tag = 'input window, operand 7, single buffered']
    #allocation12 [shape = 'u8[16384]{0}', space=vmem, size = 0x4000, scoped, tag = 'output window, operand 0']
    %14 = vsyncpa [#allocation4], 0
    %s15 = scalar_lea.sflag [#allocation4], 1
    %16 = vsyncpa %s15, 0
    %17 = vsyncpa [#allocation7], 0
    %18 = vsyncpa [#allocation10], 0
    %19 = vsyncpa [#allocation5], 0
    %s20 = scalar_lea.sflag [#allocation5], 1
    %21 = vsyncpa %s20, 0
    loop: start=0, step=1, limit=4
    $region2: #{tpu_custom_call.1} parent=1 // loop_pre_header
      _
    $region3: #{tpu_custom_call.1} parent=1 // loop_header
      %s23 = sphi 0, %s27
      %p24 = scmp.ge.s32.totalorder %s23, 4
      %s30 = sphi 0, %s42
      %s31 = sphi 0, %s38
      %s32 = sphi 0, %s30
      %s33 = sphi 0, %s31
      %s34 = sphi 0, %s32
      %s35 = sphi 0, %s33
      %s45 = sphi 0, %s47
      %s48 = sphi 0, %s45
      %s49 = sphi 0, %s48
      %s65 = sphi 0, %s49
      %s69 = sphi 0, %s69
      %s71 = sphi 0, %s69
      %s72 = sphi 0, %s71
      %s86 = sphi 0, %s72
      %s90 = sphi 0, %s90
      %s92 = sphi 0, %s90
      %s93 = sphi 0, %s92
      %s107 = sphi 0, %s93
      %s111 = sphi 0, %s111
      %s113 = sphi 0, %s111
      %s114 = sphi 0, %s113
      %s128 = sphi 0, %s114
      %s132 = sphi 0, %s132
      %s134 = sphi 0, %s132
      %s135 = sphi 0, %s134
      %s149 = sphi 0, %s135
      %s153 = sphi 0, %s153
      %s155 = sphi 0, %s153
      %s156 = sphi 0, %s155
      %s170 = sphi 0, %s156
      %s174 = sphi 0, %s174
      %s176 = sphi 0, %s174
      %s177 = sphi 0, %s176
      %s191 = sphi 0, %s177
      %s197 = sphi 0, %s199
      %s200 = sphi 0, %s197
      %s201 = sphi 0, %s200
      %s217 = sphi 0, %s201
      %s223 = sphi 0, %s225
      %s226 = sphi 0, %s223
      %s227 = sphi 0, %s226
      %s243 = sphi 0, %s227
      %s251 = sphi 0, %s253
      %s254 = sphi 0, %s251
      %s255 = sphi 0, %s254
      %s271 = sphi 0, %s255
    $region4: #{tpu_custom_call.1} parent=1 // loop_header_branch
      %26 = sbr.rel (%p24) target = $region8
    $region5: #{tpu_custom_call.1} parent=1 // loop_body
      %s28 = ssub.s32 %s23, 1
      %s29 = ssub.s32 %s23, 2
      %s36 = sadd.s32 1, %s31
      %p37 = scmp.ge.s32.totalorder %s36, 1
      %s38 = scalar_select %p37, 0, %s36
      %s39 = sadd.s32 1, %s30
      %s40 = scalar_select %p37, %s39, %s30
      %p41 = scmp.ge.s32.totalorder %s40, 2
      %s42 = scalar_select %p41, 0, %s40
      %s43 = ssub.s32 %s30, %s42
      %p44 = scmp.eq.s32.totalorder %s43, 0
      %s46 = sadd.s32 %s45, 1
      %s47 = scalar_select %p44, %s45, %s46
      %p50 = pneg %p44
      %p51 = scmp.eq.s32.totalorder %s23, 1
      %p52 = por %p50, %p51
      %p53 = scmp.ne.s32.totalorder %s45, %s48
      %p54 = scmp.eq.s32.totalorder %s23, 0
      %p55 = por %p53, %p54
      %p56 = scmp.ne.s32.totalorder %s45, %s48
      %p57 = scmp.eq.s32.totalorder %s28, 1
      %p58 = por %p56, %p57
      %p59 = scmp.ne.s32.totalorder %s48, %s49
      %p60 = scmp.eq.s32.totalorder %s28, 0
      %p61 = por %p59, %p60
      %p62 = scmp.ne.s32.totalorder %s48, %s49
      %p63 = scmp.eq.s32.totalorder %s29, 1
      %p64 = por %p62, %p63
      %p66 = scmp.ne.s32.totalorder %s49, %s65
      %p67 = scmp.eq.s32.totalorder %s29, 0
      %p68 = por %p66, %p67
      %s70 = sadd.s32 %s69, 1
      %p73 = scmp.eq.s32.totalorder %s23, 1
      %p74 = scmp.ne.s32.totalorder %s69, %s71
      %p75 = scmp.eq.s32.totalorder %s23, 0
      %p76 = por %p74, %p75
      %p77 = scmp.ne.s32.totalorder %s69, %s71
      %p78 = scmp.eq.s32.totalorder %s28, 1
      %p79 = por %p77, %p78
      %p80 = scmp.ne.s32.totalorder %s71, %s72
      %p81 = scmp.eq.s32.totalorder %s28, 0
      %p82 = por %p80, %p81
      %p83 = scmp.ne.s32.totalorder %s71, %s72
      %p84 = scmp.eq.s32.totalorder %s29, 1
      %p85 = por %p83, %p84
      %p87 = scmp.ne.s32.totalorder %s72, %s86
      %p88 = scmp.eq.s32.totalorder %s29, 0
      %p89 = por %p87, %p88
      %s91 = sadd.s32 %s90, 1
      %p94 = scmp.eq.s32.totalorder %s23, 1
      %p95 = scmp.ne.s32.totalorder %s90, %s92
      %p96 = scmp.eq.s32.totalorder %s23, 0
      %p97 = por %p95, %p96
      %p98 = scmp.ne.s32.totalorder %s90, %s92
      %p99 = scmp.eq.s32.totalorder %s28, 1
      %p100 = por %p98, %p99
      %p101 = scmp.ne.s32.totalorder %s92, %s93
      %p102 = scmp.eq.s32.totalorder %s28, 0
      %p103 = por %p101, %p102
      %p104 = scmp.ne.s32.totalorder %s92, %s93
      %p105 = scmp.eq.s32.totalorder %s29, 1
      %p106 = por %p104, %p105
      %p108 = scmp.ne.s32.totalorder %s93, %s107
      %p109 = scmp.eq.s32.totalorder %s29, 0
      %p110 = por %p108, %p109
      %s112 = sadd.s32 %s111, 1
      %p115 = scmp.eq.s32.totalorder %s23, 1
      %p116 = scmp.ne.s32.totalorder %s111, %s113
      %p117 = scmp.eq.s32.totalorder %s23, 0
      %p118 = por %p116, %p117
      %p119 = scmp.ne.s32.totalorder %s111, %s113
      %p120 = scmp.eq.s32.totalorder %s28, 1
      %p121 = por %p119, %p120
      %p122 = scmp.ne.s32.totalorder %s113, %s114
      %p123 = scmp.eq.s32.totalorder %s28, 0
      %p124 = por %p122, %p123
      %p125 = scmp.ne.s32.totalorder %s113, %s114
      %p126 = scmp.eq.s32.totalorder %s29, 1
      %p127 = por %p125, %p126
      %p129 = scmp.ne.s32.totalorder %s114, %s128
      %p130 = scmp.eq.s32.totalorder %s29, 0
      %p131 = por %p129, %p130
      %s133 = sadd.s32 %s132, 1
      %p136 = scmp.eq.s32.totalorder %s23, 1
      %p137 = scmp.ne.s32.totalorder %s132, %s134
      %p138 = scmp.eq.s32.totalorder %s23, 0
      %p139 = por %p137, %p138
      %p140 = scmp.ne.s32.totalorder %s132, %s134
      %p141 = scmp.eq.s32.totalorder %s28, 1
      %p142 = por %p140, %p141
      %p143 = scmp.ne.s32.totalorder %s134, %s135
      %p144 = scmp.eq.s32.totalorder %s28, 0
      %p145 = por %p143, %p144
      %p146 = scmp.ne.s32.totalorder %s134, %s135
      %p147 = scmp.eq.s32.totalorder %s29, 1
      %p148 = por %p146, %p147
      %p150 = scmp.ne.s32.totalorder %s135, %s149
      %p151 = scmp.eq.s32.totalorder %s29, 0
      %p152 = por %p150, %p151
      %s154 = sadd.s32 %s153, 1
      %p157 = scmp.eq.s32.totalorder %s23, 1
      %p158 = scmp.ne.s32.totalorder %s153, %s155
      %p159 = scmp.eq.s32.totalorder %s23, 0
      %p160 = por %p158, %p159
      %p161 = scmp.ne.s32.totalorder %s153, %s155
      %p162 = scmp.eq.s32.totalorder %s28, 1
      %p163 = por %p161, %p162
      %p164 = scmp.ne.s32.totalorder %s155, %s156
      %p165 = scmp.eq.s32.totalorder %s28, 0
      %p166 = por %p164, %p165
      %p167 = scmp.ne.s32.totalorder %s155, %s156
      %p168 = scmp.eq.s32.totalorder %s29, 1
      %p169 = por %p167, %p168
      %p171 = scmp.ne.s32.totalorder %s156, %s170
      %p172 = scmp.eq.s32.totalorder %s29, 0
      %p173 = por %p171, %p172
      %s175 = sadd.s32 %s174, 1
      %p178 = scmp.eq.s32.totalorder %s23, 1
      %p179 = scmp.ne.s32.totalorder %s174, %s176
      %p180 = scmp.eq.s32.totalorder %s23, 0
      %p181 = por %p179, %p180
      %p182 = scmp.ne.s32.totalorder %s174, %s176
      %p183 = scmp.eq.s32.totalorder %s28, 1
      %p184 = por %p182, %p183
      %p185 = scmp.ne.s32.totalorder %s176, %s177
      %p186 = scmp.eq.s32.totalorder %s28, 0
      %p187 = por %p185, %p186
      %p188 = scmp.ne.s32.totalorder %s176, %s177
      %p189 = scmp.eq.s32.totalorder %s29, 1
      %p190 = por %p188, %p189
      %p192 = scmp.ne.s32.totalorder %s177, %s191
      %p193 = scmp.eq.s32.totalorder %s29, 0
      %p194 = por %p192, %p193
      %s195 = ssub.s32 %s31, %s38
      %p196 = scmp.eq.s32.totalorder %s195, 0
      %s198 = sadd.s32 %s197, 1
      %s199 = scalar_select %p196, %s197, %s198
      %p202 = pneg %p196
      %p203 = scmp.eq.s32.totalorder %s23, 1
      %p204 = por %p202, %p203
      %p205 = scmp.ne.s32.totalorder %s197, %s200
      %p206 = scmp.eq.s32.totalorder %s23, 0
      %p207 = por %p205, %p206
      %p208 = scmp.ne.s32.totalorder %s197, %s200
      %p209 = scmp.eq.s32.totalorder %s28, 1
      %p210 = por %p208, %p209
      %p211 = scmp.ne.s32.totalorder %s200, %s201
      %p212 = scmp.eq.s32.totalorder %s28, 0
      %p213 = por %p211, %p212
      %p214 = scmp.ne.s32.totalorder %s200, %s201
      %p215 = scmp.eq.s32.totalorder %s29, 1
      %p216 = por %p214, %p215
      %p218 = scmp.ne.s32.totalorder %s201, %s217
      %p219 = scmp.eq.s32.totalorder %s29, 0
      %p220 = por %p218, %p219
      %s221 = ssub.s32 %s31, %s38
      %p222 = scmp.eq.s32.totalorder %s221, 0
      %s224 = sadd.s32 %s223, 1
      %s225 = scalar_select %p222, %s223, %s224
      %p228 = pneg %p222
      %p229 = scmp.eq.s32.totalorder %s23, 1
      %p230 = por %p228, %p229
      %p231 = scmp.ne.s32.totalorder %s223, %s226
      %p232 = scmp.eq.s32.totalorder %s23, 0
      %p233 = por %p231, %p232
      %p234 = scmp.ne.s32.totalorder %s223, %s226
      %p235 = scmp.eq.s32.totalorder %s28, 1
      %p236 = por %p234, %p235
      %p237 = scmp.ne.s32.totalorder %s226, %s227
      %p238 = scmp.eq.s32.totalorder %s28, 0
      %p239 = por %p237, %p238
      %p240 = scmp.ne.s32.totalorder %s226, %s227
      %p241 = scmp.eq.s32.totalorder %s29, 1
      %p242 = por %p240, %p241
      %p244 = scmp.ne.s32.totalorder %s227, %s243
      %p245 = scmp.eq.s32.totalorder %s29, 0
      %p246 = por %p244, %p245
      %s247 = ssub.s32 %s30, %s42
      %s248 = ssub.s32 %s31, %s38
      %s249 = sor.u32 %s247, %s248
      %p250 = scmp.eq.s32.totalorder %s249, 0
      %s252 = sadd.s32 %s251, 1
      %s253 = scalar_select %p250, %s251, %s252
      %p256 = pneg %p250
      %p257 = scmp.eq.s32.totalorder %s23, 1
      %p258 = por %p256, %p257
      %p259 = scmp.ne.s32.totalorder %s251, %s254
      %p260 = scmp.eq.s32.totalorder %s23, 0
      %p261 = por %p259, %p260
      %p262 = scmp.ne.s32.totalorder %s251, %s254
      %p263 = scmp.eq.s32.totalorder %s28, 1
      %p264 = por %p262, %p263
      %p265 = scmp.ne.s32.totalorder %s254, %s255
      %p266 = scmp.eq.s32.totalorder %s28, 0
      %p267 = por %p265, %p266
      %p268 = scmp.ne.s32.totalorder %s254, %s255
      %p269 = scmp.eq.s32.totalorder %s29, 1
      %p270 = por %p268, %p269
      %p272 = scmp.ne.s32.totalorder %s255, %s271
      %p273 = scmp.eq.s32.totalorder %s29, 0
      %p274 = por %p272, %p273
      %p275 = scmp.le.s32.totalorder 1, %s23
      %p276 = scmp.lt.s32.totalorder %s23, 3
      %p277 = pnand %p275, %p276
      %p278 = pneg %p277
      // Predicated region
      $region9: #{tpu_custom_call.1} parent=5 // pred_check
        _
      $region10: #{tpu_custom_call.1} parent=5 // pred_check_branch
        %280 = sbr.rel (%p277) target = $region12
      $region11: #{tpu_custom_call.1} parent=5 // pred_region
        %s281 = ssub.s32 %s23, 1
        // Predicated region
        $region13: #{tpu_custom_call.1} parent=11 // pred_check
          %p282 = pneg %p82
        $region14: #{tpu_custom_call.1} parent=11 // pred_check_branch
          %284 = sbr.rel (%p282) target = $region16
        $region15: #{tpu_custom_call.1} parent=11 // pred_region
          %s286 = ssub.s32 4096, 4096
          %287 = vsyncadd [#allocation7], %s286
          %s288 = sshll.u32 [#allocation6], 4
          %s289 = int_to_ptr.vmem [resolvable:$true] %s288
          %294 = dma.hbm_to_vmem [thread:$0]  %s1, 4096, %s289, [#allocation7], 128, 128, 8
        $region16: #{tpu_custom_call.1} parent=11 // pred_fallthru
          _
        // Predicated region
        $region17: #{tpu_custom_call.1} parent=11 // pred_check
          %p295 = pneg %p103
        $region18: #{tpu_custom_call.1} parent=11 // pred_check_branch
          %297 = sbr.rel (%p295) target = $region20
        $region19: #{tpu_custom_call.1} parent=11 // pred_region
          _
        $region20: #{tpu_custom_call.1} parent=11 // pred_fallthru
          _
        // Predicated region
        $region21: #{tpu_custom_call.1} parent=11 // pred_check
          %p298 = pneg %p124
        $region22: #{tpu_custom_call.1} parent=11 // pred_check_branch
          %300 = sbr.rel (%p298) target = $region24
        $region23: #{tpu_custom_call.1} parent=11 // pred_region
          %s302 = ssub.s32 2048, 2048
          %303 = vsyncadd [#allocation7], %s302
          %s304 = sshll.u32 [#allocation8], 4
          %s305 = int_to_ptr.vmem [resolvable:$true] %s304
          %310 = dma.hbm_to_vmem [thread:$0]  %s3, 2048, %s305, [#allocation7], 128, 128, 8
        $region24: #{tpu_custom_call.1} parent=11 // pred_fallthru
          _
        // Predicated region
        $region25: #{tpu_custom_call.1} parent=11 // pred_check
          %p311 = pneg %p145
        $region26: #{tpu_custom_call.1} parent=11 // pred_check_branch
          %313 = sbr.rel (%p311) target = $region28
        $region27: #{tpu_custom_call.1} parent=11 // pred_region
          _
        $region28: #{tpu_custom_call.1} parent=11 // pred_fallthru
          _
        // Predicated region
        $region29: #{tpu_custom_call.1} parent=11 // pred_check
          %p314 = pneg %p166
        $region30: #{tpu_custom_call.1} parent=11 // pred_check_branch
          %316 = sbr.rel (%p314) target = $region32
        $region31: #{tpu_custom_call.1} parent=11 // pred_region
          %s318 = ssub.s32 2048, 2048
          %319 = vsyncadd [#allocation10], %s318
          %s320 = sshll.u32 [#allocation9], 4
          %s321 = int_to_ptr.vmem [resolvable:$true] %s320
          %326 = dma.hbm_to_vmem [thread:$0]  %s5, 2048, %s321, [#allocation10], 128, 128, 8
        $region32: #{tpu_custom_call.1} parent=11 // pred_fallthru
          _
        // Predicated region
        $region33: #{tpu_custom_call.1} parent=11 // pred_check
          %p327 = pneg %p187
        $region34: #{tpu_custom_call.1} parent=11 // pred_check_branch
          %329 = sbr.rel (%p327) target = $region36
        $region35: #{tpu_custom_call.1} parent=11 // pred_region
          _
        $region36: #{tpu_custom_call.1} parent=11 // pred_fallthru
          _
        // Predicated region
        $region37: #{tpu_custom_call.1} parent=11 // pred_check
          %p330 = pneg %p213
        $region38: #{tpu_custom_call.1} parent=11 // pred_check_branch
          %332 = sbr.rel (%p330) target = $region40
        $region39: #{tpu_custom_call.1} parent=11 // pred_region
          %s334 = ssub.s32 2048, 2048
          %335 = vsyncadd [#allocation10], %s334
          %s336 = smul.addr %s33, 128
          %s337 = scalar_lea.hbm %s7, %s336
          %s338 = sshll.u32 [#allocation11], 4
          %s339 = int_to_ptr.vmem [resolvable:$true] %s338
          %344 = dma.hbm_to_vmem [thread:$0]  %s337, 2048, %s339, [#allocation10], 128, 128, 8
        $region40: #{tpu_custom_call.1} parent=11 // pred_fallthru
          _
        // Predicated region
        $region41: #{tpu_custom_call.1} parent=11 // pred_check
          %p345 = pneg %p239
        $region42: #{tpu_custom_call.1} parent=11 // pred_check_branch
          %347 = sbr.rel (%p345) target = $region44
        $region43: #{tpu_custom_call.1} parent=11 // pred_region
          %p348 = scmp.lt.s32.totalorder %s33, 0
          %s349 = scalar_select %p348, %s33, 0
          %s350 = scalar_lea.vmem %s8, %s349
        $region44: #{tpu_custom_call.1} parent=11 // pred_fallthru
          _
      $region12: #{tpu_custom_call.1} parent=5 // pred_fallthru
        _
      %p351 = scmp.lt.s32.totalorder %s23, 2
      // Predicated region
      $region45: #{tpu_custom_call.1} parent=5 // pred_check
        %p352 = pneg %p351
      $region46: #{tpu_custom_call.1} parent=5 // pred_check_branch
        %354 = sbr.rel (%p352) target = $region48
      $region47: #{tpu_custom_call.1} parent=5 // pred_region
        // Predicated region
        $region49: #{tpu_custom_call.1} parent=47 // pred_check
          %p355 = pneg %p55
        $region50: #{tpu_custom_call.1} parent=47 // pred_check_branch
          %357 = sbr.rel (%p355) target = $region52
        $region51: #{tpu_custom_call.1} parent=47 // pred_region
          %s358 = sand.u32 %s45, 1
          %s359 = scalar_lea.sflag [#allocation4], %s358
          %s360 = sand.u32 %s45, 1
          %s361 = smul.addr %s360, 32
          %s362 = scalar_lea.vmem [#allocation3], %s361
          %s363 = smul.u32 2, %s30
          %s365 = ssub.s32 512, 512
          %366 = vsyncadd %s359, %s365
          %s367 = smul.addr %s363, 2
          %s368 = smul.addr %s367, 128
          %s369 = scalar_lea.hbm %s0, %s368
          %s370 = sshll.u32 %s362, 4
          %s371 = int_to_ptr.vmem [resolvable:$true] %s370
          %376 = dma.hbm_to_vmem [thread:$0]  %s369, 512, %s371, %s359, 256, 256, 16
        $region52: #{tpu_custom_call.1} parent=47 // pred_fallthru
          _
      $region48: #{tpu_custom_call.1} parent=5 // pred_fallthru
        _
      %p377 = scmp.le.s32.totalorder 1, %s23
      %p378 = scmp.lt.s32.totalorder %s23, 3
      %p379 = pnand %p377, %p378
      %p380 = pneg %p379
      // Predicated region
      $region53: #{tpu_custom_call.1} parent=5 // pred_check
        _
      $region54: #{tpu_custom_call.1} parent=5 // pred_check_branch
        %382 = sbr.rel (%p379) target = $region56
      $region55: #{tpu_custom_call.1} parent=5 // pred_region
        %s383 = ssub.s32 %s23, 1
        %s384 = sand.u32 %s48, 1
        %s385 = scalar_lea.sflag [#allocation4], %s384
        %s386 = sand.u32 %s48, 1
        %s387 = smul.addr %s386, 32
        %s388 = scalar_lea.vmem [#allocation3], %s387
        // Predicated region
        $region57: #{tpu_custom_call.1} parent=55 // pred_check
          %p389 = pneg %p61
        $region58: #{tpu_custom_call.1} parent=55 // pred_check_branch
          %391 = sbr.rel (%p389) target = $region60
        $region59: #{tpu_custom_call.1} parent=55 // pred_region
          %392 = dma.done %s385, 512
        $region60: #{tpu_custom_call.1} parent=55 // pred_fallthru
          _
        // Predicated region
        $region61: #{tpu_custom_call.1} parent=55 // pred_check
          %p393 = pneg %p82
        $region62: #{tpu_custom_call.1} parent=55 // pred_check_branch
          %395 = sbr.rel (%p393) target = $region64
        $region63: #{tpu_custom_call.1} parent=55 // pred_region
          %396 = dma.done [#allocation7], 4096
        $region64: #{tpu_custom_call.1} parent=55 // pred_fallthru
          _
        // Predicated region
        $region65: #{tpu_custom_call.1} parent=55 // pred_check
          %p397 = pneg %p124
        $region66: #{tpu_custom_call.1} parent=55 // pred_check_branch
          %399 = sbr.rel (%p397) target = $region68
        $region67: #{tpu_custom_call.1} parent=55 // pred_region
          %400 = dma.done [#allocation7], 2048
        $region68: #{tpu_custom_call.1} parent=55 // pred_fallthru
          _
        // Predicated region
        $region69: #{tpu_custom_call.1} parent=55 // pred_check
          %p401 = pneg %p166
        $region70: #{tpu_custom_call.1} parent=55 // pred_check_branch
          %403 = sbr.rel (%p401) target = $region72
        $region71: #{tpu_custom_call.1} parent=55 // pred_region
          %404 = dma.done [#allocation10], 2048
        $region72: #{tpu_custom_call.1} parent=55 // pred_fallthru
          _
        // Predicated region
        $region73: #{tpu_custom_call.1} parent=55 // pred_check
          %p405 = pneg %p213
        $region74: #{tpu_custom_call.1} parent=55 // pred_check_branch
          %407 = sbr.rel (%p405) target = $region76
        $region75: #{tpu_custom_call.1} parent=55 // pred_region
          %408 = dma.done [#allocation10], 2048
        $region76: #{tpu_custom_call.1} parent=55 // pred_fallthru
          _
        %s409 = sand.u32 %s48, 1
        %s410 = scalar_lea.sflag [#allocation4], %s409
        %s411 = sand.u32 %s48, 1
        %s412 = smul.addr %s411, 32
        %s413 = scalar_lea.vmem [#allocation3], %s412
        %p414 = pneg %p61
        %p415 = pneg %p58
        %p416 = pneg %p82
        %p417 = pneg %p79
        %p418 = pneg %p103
        %p419 = pneg %p100
        %p420 = pneg %p124
        %p421 = pneg %p121
        %p422 = pneg %p145
        %p423 = pneg %p142
        %p424 = pneg %p166
        %p425 = pneg %p163
        %p426 = pneg %p187
        %p427 = pneg %p184
        %p428 = pneg %p213
        %p429 = pneg %p210
        %p430 = scmp.lt.s32.totalorder %s33, 0
        %s431 = scalar_select %p430, %s33, 0
        %s432 = scalar_lea.vmem %s8, %s431
        %p433 = pneg %p239
        %p434 = pneg %p236
        %p435 = pneg %p267
        %p436 = pneg %p264
        %s437 = sand.u32 %s254, 1
        %s438 = scalar_lea.sflag [#allocation5], %s437
        %s439 = sand.u32 %s254, 1
        %s440 = smul.addr %s439, 16
        %s441 = scalar_lea.vmem [#allocation12], %s440
        %s442 = smul.u32 2, %s32
        %p443 = scmp.lt.s32.totalorder %s33, 0
        %s444 = scalar_select %p443, %s33, 0
        %s445 = scalar_lea.vmem %s8, %s444
        %s446 = smul.u32 2, %s32
        %p447 = scmp.eq.s32.totalorder %s33, 0
        // Predicated region
        $region77: #{tpu_custom_call.1} parent=55 // pred_check
          %p448 = pneg %p447
        $region78: #{tpu_custom_call.1} parent=55 // pred_check_branch
          %450 = sbr.rel (%p448) target = $region80
        $region79: #{tpu_custom_call.1} parent=55 // pred_region
          %v451 = vld [vmem:[%s388] sm:$0xff]
          %v452 = vld [vmem:[%s388 + $0x8] sm:$0xff]
          %v453 = vld [vmem:[%s388 + $0x10] sm:$0xff]
          %v454 = vld [vmem:[%s388 + $0x18] sm:$0xff]
          %v455 = vld [vmem:[#allocation6] sm:$0xff]
          %v456 = vld [vmem:[#allocation6 + $0x8] sm:$0xff]
          %v457 = vld [vmem:[#allocation6 + $0x10] sm:$0xff]
          %v458 = vld [vmem:[#allocation6 + $0x18] sm:$0xff]
          %v459 = vld [vmem:[#allocation6 + $0x20] sm:$0xff]
          %v460 = vld [vmem:[#allocation6 + $0x28] sm:$0xff]
          %v461 = vld [vmem:[#allocation6 + $0x30] sm:$0xff]
          %v462 = vld [vmem:[#allocation6 + $0x38] sm:$0xff]
          %v463 = vld [vmem:[#allocation6 + $0x40] sm:$0xff]
          %v464 = vld [vmem:[#allocation6 + $0x48] sm:$0xff]
          %v465 = vld [vmem:[#allocation6 + $0x50] sm:$0xff]
          %v466 = vld [vmem:[#allocation6 + $0x58] sm:$0xff]
          %v467 = vld [vmem:[#allocation6 + $0x60] sm:$0xff]
          %v468 = vld [vmem:[#allocation6 + $0x68] sm:$0xff]
          %v469 = vld [vmem:[#allocation6 + $0x70] sm:$0xff]
          %v470 = vld [vmem:[#allocation6 + $0x78] sm:$0xff]
          %v471 = vld [vmem:[#allocation6 + $0x80] sm:$0xff]
          %v472 = vld [vmem:[#allocation6 + $0x88] sm:$0xff]
          %v473 = vld [vmem:[#allocation6 + $0x90] sm:$0xff]
          %v474 = vld [vmem:[#allocation6 + $0x98] sm:$0xff]
          %v475 = vld [vmem:[#allocation6 + $0xa0] sm:$0xff]
          %v476 = vld [vmem:[#allocation6 + $0xa8] sm:$0xff]
          %v477 = vld [vmem:[#allocation6 + $0xb0] sm:$0xff]
          %v478 = vld [vmem:[#allocation6 + $0xb8] sm:$0xff]
          %v479 = vld [vmem:[#allocation6 + $0xc0] sm:$0xff]
          %v480 = vld [vmem:[#allocation6 + $0xc8] sm:$0xff]
          %v481 = vld [vmem:[#allocation6 + $0xd0] sm:$0xff]
          %v482 = vld [vmem:[#allocation6 + $0xd8] sm:$0xff]
          %v483 = vld [vmem:[#allocation6 + $0xe0] sm:$0xff]
          %v484 = vld [vmem:[#allocation6 + $0xe8] sm:$0xff]
          %v485 = vld [vmem:[#allocation6 + $0xf0] sm:$0xff]
          %v486 = vld [vmem:[#allocation6 + $0xf8] sm:$0xff]
          %v487 = vld [vmem:[%s2] sm:$0x1]
          %v489 = vlaneseq
          %v490 = vshrl.u32 %v489, 7
          %v491 = vsub.s32 0, %v490
          %v492 = vrot.slane %v487, %v491
          %494 = vmatprep.subr.mxu0 0.0
          %495 = vmatpush1.msra.mxu0 %v455
          %496 = vmatprep.subr.mxu0 0.0
          %497 = vmatpush1.msra.mxu0 %v456
          %498 = vmatprep.subr.mxu0 0.0
          %499 = vmatpush1.msra.mxu0 %v457
          %500 = vmatprep.subr.mxu0 0.0
          %501 = vmatpush1.msra.mxu0 %v458
          %502 = vmatprep.subr.mxu0 0.0
          %503 = vmatpush1.msra.mxu0 %v459
          %504 = vmatprep.subr.mxu0 0.0
          %505 = vmatpush1.msra.mxu0 %v460
          %506 = vmatprep.subr.mxu0 0.0
          %507 = vmatpush1.msra.mxu0 %v461
          %508 = vmatprep.subr.mxu0 0.0
          %509 = vmatpush1.msra.mxu0 %v462
          %510 = vmatprep.subr.mxu0 0.0
          %511 = vmatpush1.msra.mxu0 %v463
          %512 = vmatprep.subr.mxu0 0.0
          %513 = vmatpush1.msra.mxu0 %v464
          %514 = vmatprep.subr.mxu0 0.0
          %515 = vmatpush1.msra.mxu0 %v465
          %516 = vmatprep.subr.mxu0 0.0
          %517 = vmatpush1.msra.mxu0 %v466
          %518 = vmatprep.subr.mxu0 0.0
          %519 = vmatpush1.msra.mxu0 %v467
          %520 = vmatprep.subr.mxu0 0.0
          %521 = vmatpush1.msra.mxu0 %v468
          %522 = vmatprep.subr.mxu0 0.0
          %523 = vmatpush1.msra.mxu0 %v469
          %524 = vmatprep.subr.mxu0 0.0
          %525 = vmatpush1.msra.mxu0 %v470
          %526 = vmatprep.subr.mxu0 0.0
          %527 = vmatpush1.msra.mxu0 %v471
          %528 = vmatprep.subr.mxu0 0.0
          %529 = vmatpush1.msra.mxu0 %v472
          %530 = vmatprep.subr.mxu0 0.0
          %531 = vmatpush1.msra.mxu0 %v473
          %532 = vmatprep.subr.mxu0 0.0
          %533 = vmatpush1.msra.mxu0 %v474
          %534 = vmatprep.subr.mxu0 0.0
          %535 = vmatpush1.msra.mxu0 %v475
          %536 = vmatprep.subr.mxu0 0.0
          %537 = vmatpush1.msra.mxu0 %v476
          %538 = vmatprep.subr.mxu0 0.0
          %539 = vmatpush1.msra.mxu0 %v477
          %540 = vmatprep.subr.mxu0 0.0
          %541 = vmatpush1.msra.mxu0 %v478
          %542 = vmatprep.subr.mxu0 0.0
          %543 = vmatpush1.msra.mxu0 %v479
          %544 = vmatprep.subr.mxu0 0.0
          %545 = vmatpush1.msra.mxu0 %v480
          %546 = vmatprep.subr.mxu0 0.0
          %547 = vmatpush1.msra.mxu0 %v481
          %548 = vmatprep.subr.mxu0 0.0
          %549 = vmatpush1.msra.mxu0 %v482
          %550 = vmatprep.subr.mxu0 0.0
          %551 = vmatpush1.msra.mxu0 %v483
          %552 = vmatprep.subr.mxu0 0.0
          %553 = vmatpush1.msra.mxu0 %v484
          %554 = vmatprep.subr.mxu0 0.0
          %555 = vmatpush1.msra.mxu0 %v485
          %556 = vmatprep.subr.mxu0 0.0
          %557 = vmatpush1.msra.mxu0 %v486
          %558 = vmatprep.mubr.f32.mxu0 %v452
          %559 = vmatmul.mubr.f32.gmra.mrb[0].mxu0 %v451
          %v560 = vpop.f32.mrb[0].mxu0
          %v561 = vadd.f32 %v492, %v560
          %v562 = vpop.f32.mrb[0].mxu0
          %563 = vmatprep.mubr.f32.mxu0 %v454
          %564 = vmatmul.mubr.f32.gmra.mrb[0].mxu0 %v453
          %v565 = vpop.f32.mrb[0].mxu0
          %v566 = vadd.f32 %v492, %v565
          %v567 = vpop.f32.mrb[0].mxu0
          %568 = vdwg.mxu0
          %v569 = vmax.f32 %v561, 0.0
          %v570 = vmax.f32 %v566, 0.0
          %v571 = vld [vmem:[#allocation8] sm:$0xff]
          %v572 = vld [vmem:[#allocation8 + $0x8] sm:$0xff]
          %v573 = vld [vmem:[#allocation8 + $0x10] sm:$0xff]
          %v574 = vld [vmem:[#allocation8 + $0x18] sm:$0xff]
          %v575 = vld [vmem:[#allocation8 + $0x20] sm:$0xff]
          %v576 = vld [vmem:[#allocation8 + $0x28] sm:$0xff]
          %v577 = vld [vmem:[#allocation8 + $0x30] sm:$0xff]
          %v578 = vld [vmem:[#allocation8 + $0x38] sm:$0xff]
          %v579 = vld [vmem:[#allocation8 + $0x40] sm:$0xff]
          %v580 = vld [vmem:[#allocation8 + $0x48] sm:$0xff]
          %v581 = vld [vmem:[#allocation8 + $0x50] sm:$0xff]
          %v582 = vld [vmem:[#allocation8 + $0x58] sm:$0xff]
          %v583 = vld [vmem:[#allocation8 + $0x60] sm:$0xff]
          %v584 = vld [vmem:[#allocation8 + $0x68] sm:$0xff]
          %v585 = vld [vmem:[#allocation8 + $0x70] sm:$0xff]
          %v586 = vld [vmem:[#allocation8 + $0x78] sm:$0xff]
          %v587 = vld [vmem:[%s4] sm:$0x1]
          %v589 = vlaneseq
          %v590 = vshrl.u32 %v589, 7
          %v591 = vsub.s32 0, %v590
          %v592 = vrot.slane %v587, %v591
          %594 = vmatprep.subr.mxu0 0.0
          %595 = vmatpush1.msra.mxu0 %v571
          %596 = vmatprep.subr.mxu0 0.0
          %597 = vmatpush1.msra.mxu0 %v572
          %598 = vmatprep.subr.mxu0 0.0
          %599 = vmatpush1.msra.mxu0 %v573
          %600 = vmatprep.subr.mxu0 0.0
          %601 = vmatpush1.msra.mxu0 %v574
          %602 = vmatprep.subr.mxu0 0.0
          %603 = vmatpush1.msra.mxu0 %v575
          %604 = vmatprep.subr.mxu0 0.0
          %605 = vmatpush1.msra.mxu0 %v576
          %606 = vmatprep.subr.mxu0 0.0
          %607 = vmatpush1.msra.mxu0 %v577
          %608 = vmatprep.subr.mxu0 0.0
          %609 = vmatpush1.msra.mxu0 %v578
          %610 = vmatprep.subr.mxu0 0.0
          %611 = vmatpush1.msra.mxu0 %v579
          %612 = vmatprep.subr.mxu0 0.0
          %613 = vmatpush1.msra.mxu0 %v580
          %614 = vmatprep.subr.mxu0 0.0
          %615 = vmatpush1.msra.mxu0 %v581
          %616 = vmatprep.subr.mxu0 0.0
          %617 = vmatpush1.msra.mxu0 %v582
          %618 = vmatprep.subr.mxu0 0.0
          %619 = vmatpush1.msra.mxu0 %v583
          %620 = vmatprep.subr.mxu0 0.0
          %621 = vmatpush1.msra.mxu0 %v584
          %622 = vmatprep.subr.mxu0 0.0
          %623 = vmatpush1.msra.mxu0 %v585
          %624 = vmatprep.subr.mxu0 0.0
          %625 = vmatpush1.msra.mxu0 %v586
          %626 = vmatprep.subr.mxu0 0.0
          %627 = vmatpush1.msra.mxu0 0.0
          %628 = vmatprep.subr.mxu0 0.0
          %629 = vmatpush1.msra.mxu0 0.0
          %630 = vmatprep.subr.mxu0 0.0
          %631 = vmatpush1.msra.mxu0 0.0
          %632 = vmatprep.subr.mxu0 0.0
          %633 = vmatpush1.msra.mxu0 0.0
          %634 = vmatprep.subr.mxu0 0.0
          %635 = vmatpush1.msra.mxu0 0.0
          %636 = vmatprep.subr.mxu0 0.0
          %637 = vmatpush1.msra.mxu0 0.0
          %638 = vmatprep.subr.mxu0 0.0
          %639 = vmatpush1.msra.mxu0 0.0
          %640 = vmatprep.subr.mxu0 0.0
          %641 = vmatpush1.msra.mxu0 0.0
          %642 = vmatprep.subr.mxu0 0.0
          %643 = vmatpush1.msra.mxu0 0.0
          %644 = vmatprep.subr.mxu0 0.0
          %645 = vmatpush1.msra.mxu0 0.0
          %646 = vmatprep.subr.mxu0 0.0
          %647 = vmatpush1.msra.mxu0 0.0
          %648 = vmatprep.subr.mxu0 0.0
          %649 = vmatpush1.msra.mxu0 0.0
          %650 = vmatprep.subr.mxu0 0.0
          %651 = vmatpush1.msra.mxu0 0.0
          %652 = vmatprep.subr.mxu0 0.0
          %653 = vmatpush1.msra.mxu0 0.0
          %654 = vmatprep.subr.mxu0 0.0
          %655 = vmatpush1.msra.mxu0 0.0
          %656 = vmatprep.subr.mxu0 0.0
          %657 = vmatpush1.msra.mxu0 0.0
          %658 = vmatprep.mubr.f32.mxu0 0.0
          %659 = vmatmul.mubr.f32.gmra.mrb[0].mxu0 %v569
          %v660 = vpop.f32.mrb[0].mxu0
          %v661 = vadd.f32 %v592, %v660
          %v662 = vpop.f32.mrb[0].mxu0
          %663 = vmatprep.mubr.f32.mxu0 0.0
          %664 = vmatmul.mubr.f32.gmra.mrb[0].mxu0 %v570
          %v665 = vpop.f32.mrb[0].mxu0
          %v666 = vadd.f32 %v592, %v665
          %v667 = vpop.f32.mrb[0].mxu0
          %668 = vdwg.mxu0
          %v669 = vmax.f32 %v661, 0.0
          %v670 = vmax.f32 %v666, 0.0
          %v671 = vld [vmem:[#allocation9] sm:$0xff]
          %v672 = vld [vmem:[#allocation9 + $0x8] sm:$0xff]
          %v673 = vld [vmem:[#allocation9 + $0x10] sm:$0xff]
          %v674 = vld [vmem:[#allocation9 + $0x18] sm:$0xff]
          %v675 = vld [vmem:[#allocation9 + $0x20] sm:$0xff]
          %v676 = vld [vmem:[#allocation9 + $0x28] sm:$0xff]
          %v677 = vld [vmem:[#allocation9 + $0x30] sm:$0xff]
          %v678 = vld [vmem:[#allocation9 + $0x38] sm:$0xff]
          %v679 = vld [vmem:[#allocation9 + $0x40] sm:$0xff]
          %v680 = vld [vmem:[#allocation9 + $0x48] sm:$0xff]
          %v681 = vld [vmem:[#allocation9 + $0x50] sm:$0xff]
          %v682 = vld [vmem:[#allocation9 + $0x58] sm:$0xff]
          %v683 = vld [vmem:[#allocation9 + $0x60] sm:$0xff]
          %v684 = vld [vmem:[#allocation9 + $0x68] sm:$0xff]
          %v685 = vld [vmem:[#allocation9 + $0x70] sm:$0xff]
          %v686 = vld [vmem:[#allocation9 + $0x78] sm:$0xff]
          %v687 = vld [vmem:[%s6] sm:$0x1]
          %v689 = vlaneseq
          %v690 = vshrl.u32 %v689, 7
          %v691 = vsub.s32 0, %v690
          %v692 = vrot.slane %v687, %v691
          %694 = vmatprep.subr.mxu0 0.0
          %695 = vmatpush1.msra.mxu0 %v671
          %696 = vmatprep.subr.mxu0 0.0
          %697 = vmatpush1.msra.mxu0 %v672
          %698 = vmatprep.subr.mxu0 0.0
          %699 = vmatpush1.msra.mxu0 %v673
          %700 = vmatprep.subr.mxu0 0.0
          %701 = vmatpush1.msra.mxu0 %v674
          %702 = vmatprep.subr.mxu0 0.0
          %703 = vmatpush1.msra.mxu0 %v675
          %704 = vmatprep.subr.mxu0 0.0
          %705 = vmatpush1.msra.mxu0 %v676
          %706 = vmatprep.subr.mxu0 0.0
          %707 = vmatpush1.msra.mxu0 %v677
          %708 = vmatprep.subr.mxu0 0.0
          %709 = vmatpush1.msra.mxu0 %v678
          %710 = vmatprep.subr.mxu0 0.0
          %711 = vmatpush1.msra.mxu0 %v679
          %712 = vmatprep.subr.mxu0 0.0
          %713 = vmatpush1.msra.mxu0 %v680
          %714 = vmatprep.subr.mxu0 0.0
          %715 = vmatpush1.msra.mxu0 %v681
          %716 = vmatprep.subr.mxu0 0.0
          %717 = vmatpush1.msra.mxu0 %v682
          %718 = vmatprep.subr.mxu0 0.0
          %719 = vmatpush1.msra.mxu0 %v683
          %720 = vmatprep.subr.mxu0 0.0
          %721 = vmatpush1.msra.mxu0 %v684
          %722 = vmatprep.subr.mxu0 0.0
          %723 = vmatpush1.msra.mxu0 %v685
          %724 = vmatprep.subr.mxu0 0.0
          %725 = vmatpush1.msra.mxu0 %v686
          %726 = vmatprep.subr.mxu0 0.0
          %727 = vmatpush1.msra.mxu0 0.0
          %728 = vmatprep.subr.mxu0 0.0
          %729 = vmatpush1.msra.mxu0 0.0
          %730 = vmatprep.subr.mxu0 0.0
          %731 = vmatpush1.msra.mxu0 0.0
          %732 = vmatprep.subr.mxu0 0.0
          %733 = vmatpush1.msra.mxu0 0.0
          %734 = vmatprep.subr.mxu0 0.0
          %735 = vmatpush1.msra.mxu0 0.0
          %736 = vmatprep.subr.mxu0 0.0
          %737 = vmatpush1.msra.mxu0 0.0
          %738 = vmatprep.subr.mxu0 0.0
          %739 = vmatpush1.msra.mxu0 0.0
          %740 = vmatprep.subr.mxu0 0.0
          %741 = vmatpush1.msra.mxu0 0.0
          %742 = vmatprep.subr.mxu0 0.0
          %743 = vmatpush1.msra.mxu0 0.0
          %744 = vmatprep.subr.mxu0 0.0
          %745 = vmatpush1.msra.mxu0 0.0
          %746 = vmatprep.subr.mxu0 0.0
          %747 = vmatpush1.msra.mxu0 0.0
          %748 = vmatprep.subr.mxu0 0.0
          %749 = vmatpush1.msra.mxu0 0.0
          %750 = vmatprep.subr.mxu0 0.0
          %751 = vmatpush1.msra.mxu0 0.0
          %752 = vmatprep.subr.mxu0 0.0
          %753 = vmatpush1.msra.mxu0 0.0
          %754 = vmatprep.subr.mxu0 0.0
          %755 = vmatpush1.msra.mxu0 0.0
          %756 = vmatprep.subr.mxu0 0.0
          %757 = vmatpush1.msra.mxu0 0.0
          %758 = vmatprep.mubr.f32.mxu0 0.0
          %759 = vmatmul.mubr.f32.gmra.mrb[0].mxu0 %v669
          %v760 = vpop.f32.mrb[0].mxu0
          %v761 = vadd.f32 %v692, %v760
          %v762 = vpop.f32.mrb[0].mxu0
          %763 = vmatprep.mubr.f32.mxu0 0.0
          %764 = vmatmul.mubr.f32.gmra.mrb[0].mxu0 %v670
          %v765 = vpop.f32.mrb[0].mxu0
          %v766 = vadd.f32 %v692, %v765
          %v767 = vpop.f32.mrb[0].mxu0
          %768 = vdwg.mxu0
          %v769 = vmax.f32 %v761, 0.0
          %v770 = vmax.f32 %v766, 0.0
          %771 = vst [vmem:[#allocation2] sm:$0xff] %v769
          %772 = vst [vmem:[#allocation2 + $0x8] sm:$0xff] %v770
        $region80: #{tpu_custom_call.1} parent=55 // pred_fallthru
          _
        %v773 = vld [vmem:[#allocation2] sm:$0xff]
        %v774 = vld [vmem:[#allocation2 + $0x8] sm:$0xff]
        %v775 = vld [vmem:[#allocation11] sm:$0xff]
        %v776 = vld [vmem:[#allocation11 + $0x8] sm:$0xff]
        %v777 = vld [vmem:[#allocation11 + $0x10] sm:$0xff]
        %v778 = vld [vmem:[#allocation11 + $0x18] sm:$0xff]
        %v779 = vld [vmem:[#allocation11 + $0x20] sm:$0xff]
        %v780 = vld [vmem:[#allocation11 + $0x28] sm:$0xff]
        %v781 = vld [vmem:[#allocation11 + $0x30] sm:$0xff]
        %v782 = vld [vmem:[#allocation11 + $0x38] sm:$0xff]
        %v783 = vld [vmem:[#allocation11 + $0x40] sm:$0xff]
        %v784 = vld [vmem:[#allocation11 + $0x48] sm:$0xff]
        %v785 = vld [vmem:[#allocation11 + $0x50] sm:$0xff]
        %v786 = vld [vmem:[#allocation11 + $0x58] sm:$0xff]
        %v787 = vld [vmem:[#allocation11 + $0x60] sm:$0xff]
        %v788 = vld [vmem:[#allocation11 + $0x68] sm:$0xff]
        %v789 = vld [vmem:[#allocation11 + $0x70] sm:$0xff]
        %v790 = vld [vmem:[#allocation11 + $0x78] sm:$0xff]
        %v791 = vld [vmem:[%s445] sm:$0x1]
        %v793 = vlaneseq
        %v794 = vshrl.u32 %v793, 7
        %v795 = vsub.s32 0, %v794
        %v796 = vrot.slane %v791, %v795
        %798 = vmatprep.subr.mxu0 0.0
        %799 = vmatpush1.msra.mxu0 %v775
        %800 = vmatprep.subr.mxu0 0.0
        %801 = vmatpush1.msra.mxu0 %v776
        %802 = vmatprep.subr.mxu0 0.0
        %803 = vmatpush1.msra.mxu0 %v777
        %804 = vmatprep.subr.mxu0 0.0
        %805 = vmatpush1.msra.mxu0 %v778
        %806 = vmatprep.subr.mxu0 0.0
        %807 = vmatpush1.msra.mxu0 %v779
        %808 = vmatprep.subr.mxu0 0.0
        %809 = vmatpush1.msra.mxu0 %v780
        %810 = vmatprep.subr.mxu0 0.0
        %811 = vmatpush1.msra.mxu0 %v781
        %812 = vmatprep.subr.mxu0 0.0
        %813 = vmatpush1.msra.mxu0 %v782
        %814 = vmatprep.subr.mxu0 0.0
        %815 = vmatpush1.msra.mxu0 %v783
        %816 = vmatprep.subr.mxu0 0.0
        %817 = vmatpush1.msra.mxu0 %v784
        %818 = vmatprep.subr.mxu0 0.0
        %819 = vmatpush1.msra.mxu0 %v785
        %820 = vmatprep.subr.mxu0 0.0
        %821 = vmatpush1.msra.mxu0 %v786
        %822 = vmatprep.subr.mxu0 0.0
        %823 = vmatpush1.msra.mxu0 %v787
        %824 = vmatprep.subr.mxu0 0.0
        %825 = vmatpush1.msra.mxu0 %v788
        %826 = vmatprep.subr.mxu0 0.0
        %827 = vmatpush1.msra.mxu0 %v789
        %828 = vmatprep.subr.mxu0 0.0
        %829 = vmatpush1.msra.mxu0 %v790
        %830 = vmatprep.subr.mxu0 0.0
        %831 = vmatpush1.msra.mxu0 0.0
        %832 = vmatprep.subr.mxu0 0.0
        %833 = vmatpush1.msra.mxu0 0.0
        %834 = vmatprep.subr.mxu0 0.0
        %835 = vmatpush1.msra.mxu0 0.0
        %836 = vmatprep.subr.mxu0 0.0
        %837 = vmatpush1.msra.mxu0 0.0
        %838 = vmatprep.subr.mxu0 0.0
        %839 = vmatpush1.msra.mxu0 0.0
        %840 = vmatprep.subr.mxu0 0.0
        %841 = vmatpush1.msra.mxu0 0.0
        %842 = vmatprep.subr.mxu0 0.0
        %843 = vmatpush1.msra.mxu0 0.0
        %844 = vmatprep.subr.mxu0 0.0
        %845 = vmatpush1.msra.mxu0 0.0
        %846 = vmatprep.subr.mxu0 0.0
        %847 = vmatpush1.msra.mxu0 0.0
        %848 = vmatprep.subr.mxu0 0.0
        %849 = vmatpush1.msra.mxu0 0.0
        %850 = vmatprep.subr.mxu0 0.0
        %851 = vmatpush1.msra.mxu0 0.0
        %852 = vmatprep.subr.mxu0 0.0
        %853 = vmatpush1.msra.mxu0 0.0
        %854 = vmatprep.subr.mxu0 0.0
        %855 = vmatpush1.msra.mxu0 0.0
        %856 = vmatprep.subr.mxu0 0.0
        %857 = vmatpush1.msra.mxu0 0.0
        %858 = vmatprep.subr.mxu0 0.0
        %859 = vmatpush1.msra.mxu0 0.0
        %860 = vmatprep.subr.mxu0 0.0
        %861 = vmatpush1.msra.mxu0 0.0
        %862 = vmatprep.mubr.f32.mxu0 0.0
        %863 = vmatmul.mubr.f32.gmra.mrb[0].mxu0 %v773
        %v864 = vpop.f32.mrb[0].mxu0
        %v865 = vadd.f32 %v796, %v864
        %v866 = vpop.f32.mrb[0].mxu0
        %867 = vmatprep.mubr.f32.mxu0 0.0
        %868 = vmatmul.mubr.f32.gmra.mrb[0].mxu0 %v774
        %v869 = vpop.f32.mrb[0].mxu0
        %v870 = vadd.f32 %v796, %v869
        %v871 = vpop.f32.mrb[0].mxu0
        %872 = vdwg.mxu0
        %873 = vst [vmem:[%s441] sm:$0xff] %v865
        %874 = vst [vmem:[%s441 + $0x8] sm:$0xff] %v870
        %s875 = sand.u32 %s254, 1
        %s876 = scalar_lea.sflag [#allocation5], %s875
        %s877 = sand.u32 %s254, 1
        %s878 = smul.addr %s877, 16
        %s879 = scalar_lea.vmem [#allocation12], %s878
        // Predicated region
        $region81: #{tpu_custom_call.1} parent=55 // pred_check
          %p880 = pneg %p264
        $region82: #{tpu_custom_call.1} parent=55 // pred_check_branch
          %882 = sbr.rel (%p880) target = $region84
        $region83: #{tpu_custom_call.1} parent=55 // pred_region
          %s883 = smul.u32 2, %s32
          %s885 = ssub.s32 256, 256
          %886 = vsyncadd %s876, %s885
          %s887 = sadd.s32 %s33, %s883
          %s888 = smul.addr %s887, 128
          %s889 = scalar_lea.hbm %s9, %s888
          %s890 = sshll.u32 %s879, 4
          %s891 = int_to_ptr.vmem [resolvable:$true] %s890
          %896 = dma.vmem_to_hbm [thread:$0]  %s891, 256, %s889, %s876, 128, 128, 8
        $region84: #{tpu_custom_call.1} parent=55 // pred_fallthru
          _
      $region56: #{tpu_custom_call.1} parent=5 // pred_fallthru
        _
      %p897 = scmp.le.s32.totalorder 2, %s23
      // Predicated region
      $region85: #{tpu_custom_call.1} parent=5 // pred_check
        %p898 = pneg %p897
      $region86: #{tpu_custom_call.1} parent=5 // pred_check_branch
        %900 = sbr.rel (%p898) target = $region88
      $region87: #{tpu_custom_call.1} parent=5 // pred_region
        %s901 = ssub.s32 %s23, 2
        // Predicated region
        $region89: #{tpu_custom_call.1} parent=87 // pred_check
          %p902 = pneg %p270
        $region90: #{tpu_custom_call.1} parent=87 // pred_check_branch
          %904 = sbr.rel (%p902) target = $region92
        $region91: #{tpu_custom_call.1} parent=87 // pred_region
          %s905 = sand.u32 %s255, 1
          %s906 = scalar_lea.sflag [#allocation5], %s905
          %s907 = sand.u32 %s255, 1
          %s908 = smul.addr %s907, 16
          %s909 = scalar_lea.vmem [#allocation12], %s908
          %910 = dma.done %s906, 256
        $region92: #{tpu_custom_call.1} parent=87 // pred_fallthru
          _
      $region88: #{tpu_custom_call.1} parent=5 // pred_fallthru
        _
    $region6: #{tpu_custom_call.1} parent=1 // loop_footer
      %s27 = sadd.s32 1, %s23
    $region7: #{tpu_custom_call.1} parent=1 // loop_footer_branch
      %22 = sbr.rel target = $region3
    $region8: #{tpu_custom_call.1} parent=1 // loop_exit
      _
    %911 = vsyncpa [#allocation4], 1
    %s912 = scalar_lea.sflag [#allocation4], 1
    %913 = vsyncpa %s912, 1
    %914 = vsyncpa [#allocation7], 1
    %915 = vsyncpa [#allocation10], 1
    %916 = vsyncpa [#allocation5], 1
    %s917 = scalar_lea.sflag [#allocation5], 1
    %918 = vsyncpa %s917, 1

</llo_original>
